<compile_context>
chip_gen: v7x
topology: tpu7x:2x2x1
jax: 0.10.0
libtpu: 0.0.40
codegen_flags: <defaults>
</compile_context>

<pallas_src>
import functools
import math

import jax
import jax.numpy as jnp
from jax.experimental import pallas as pl
from jax.experimental.pallas import tpu as pltpu

# ---- small config, consistent with SiglipVisionConfig semantics ----
BATCH = 2
SEQ = 16             # num_patches
HIDDEN = 32          # hidden_size / embed_dim
NUM_HEADS = 4        # num_attention_heads
HEAD_DIM = HIDDEN // NUM_HEADS
INTERMEDIATE = 64    # intermediate_size
LN_EPS = 1e-6


def _layernorm(h, w, b, eps):
    mu = jnp.mean(h, axis=-1, keepdims=True)
    var = jnp.mean((h - mu) ** 2, axis=-1, keepdims=True)   # biased var, like torch
    return (h - mu) * jax.lax.rsqrt(var + eps) * w + b


def _gelu_tanh(x):
    c = math.sqrt(2.0 / math.pi)
    return 0.5 * x * (1.0 + jnp.tanh(c * (x + 0.044715 * x * x * x)))


def encoder_layer_kernel(
    x_ref,
    ln1_w, ln1_b,
    wqkv, bqkv, wo, bo,
    ln2_w, ln2_b,
    w1, b1, w2, b2,
    o_ref,
    *, num_heads, head_dim, eps,
):
    f32, bf16 = jnp.float32, jnp.bfloat16
    H, Dh = num_heads, head_dim

    x = x_ref[0]                                   # (S, D) fp32, this batch element
    S, D = x.shape

    # ---- LayerNorm 1 (fp32) ----
    h = _layernorm(x, ln1_w[...], ln1_b[...], eps)

    # ---- fused QKV projection: one (S, D) @ (D, 3D) matmul, bf16 in / fp32 acc ----
    # 1/sqrt(Dh) is already folded into the Q columns of wqkv/bqkv.
    qkv = jnp.dot(h.astype(bf16), wqkv[...], preferred_element_type=f32) + bqkv[...]

    # ---- head split: lane-dense (S, D) thirds, bf16 cast BEFORE the relayout,
    #      one reshape each to (S, H, Dh) (no per-head 8-lane slicing) ----
    q = qkv[:, :D].astype(bf16).reshape(S, H, Dh)
    k = qkv[:, D:2 * D].astype(bf16).reshape(S, H, Dh)
    v = qkv[:, 2 * D:].astype(bf16).reshape(S, H, Dh)

    # ---- per-batch attention: (H, S, S) scores, no cross-batch mask needed ----
    s = jnp.einsum("qhd,khd->hqk", q, k, preferred_element_type=f32)    # (H, S, S)
    s = s - jnp.max(s, axis=-1, keepdims=True)
    p = jnp.exp(s)
    p = p * pl.reciprocal(jnp.sum(p, axis=-1, keepdims=True), approx=True)

    # ---- PV with heads returned to the lane axis, then ONE (S,D)@(D,D) out-proj ----
    o3 = jnp.einsum("hqk,khd->qhd", p.astype(bf16), v,
                    preferred_element_type=f32)                         # (S, H, Dh)
    attn = jnp.dot(o3.reshape(S, D).astype(bf16), wo[...],
                   preferred_element_type=f32) + bo[...]                # (S, D)

    # ---- residual 1 ----
    x1 = x + attn

    # ---- LayerNorm 2 + MLP ----
    h2 = _layernorm(x1, ln2_w[...], ln2_b[...], eps)
    m = jnp.dot(h2.astype(bf16), w1[...], preferred_element_type=f32) + b1[...]
    m = _gelu_tanh(m)                                                   # fp32
    m = jnp.dot(m.astype(bf16), w2[...], preferred_element_type=f32) + b2[...]

    # ---- residual 2 ----
    o_ref[0] = x1 + m


def pack_params(p, head_dim):
    """Wrapper-side packing: fused QKV (scale folded into Q), bf16 matmul weights."""
    scale = 1.0 / math.sqrt(head_dim)
    return {
        "ln1_w": p["ln1_w"], "ln1_b": p["ln1_b"],
        "wqkv": jnp.concatenate([p["wq"] * scale, p["wk"], p["wv"]],
                                axis=1).astype(jnp.bfloat16),
        "bqkv": jnp.concatenate([p["bq"] * scale, p["bk"], p["bv"]], axis=1),
        "wo": p["wo"].astype(jnp.bfloat16), "bo": p["bo"],
        "ln2_w": p["ln2_w"], "ln2_b": p["ln2_b"],
        "w1": p["w1"].astype(jnp.bfloat16), "b1": p["b1"],
        "w2": p["w2"].astype(jnp.bfloat16), "b2": p["b2"],
    }


_PARAM_ORDER = ["ln1_w", "ln1_b", "wqkv", "bqkv", "wo", "bo",
                "ln2_w", "ln2_b", "w1", "b1", "w2", "b2"]


def siglip_encoder_layer(x, params):
    B, S, D = x.shape
    pk = pack_params(params, HEAD_DIM)
    args = [x] + [pk[n] for n in _PARAM_ORDER]

    def resident_spec(a):
        # full-array block, constant block index -> fetched once, stays in VMEM
        return pl.BlockSpec(a.shape, lambda b, _nd=a.ndim: (0,) * _nd)

    kernel = functools.partial(
        encoder_layer_kernel,
        num_heads=NUM_HEADS, head_dim=HEAD_DIM, eps=LN_EPS,
    )

    return pl.pallas_call(
        kernel,
        out_shape=jax.ShapeDtypeStruct((B, S, D), jnp.float32),
        grid=(B,),
        in_specs=[pl.BlockSpec((1, S, D), lambda b: (b, 0, 0))]
                 + [resident_spec(pk[n]) for n in _PARAM_ORDER],
        out_specs=pl.BlockSpec((1, S, D), lambda b: (b, 0, 0)),
        compiler_params=pltpu.CompilerParams(
            dimension_semantics=("parallel",)),
    )(*args)


def init_params(key):
    ks = jax.random.split(key, 16)
    D, I = HIDDEN, INTERMEDIATE

    def lin(k, fan_in, fan_out):
        s = 1.0 / math.sqrt(fan_in)
        return jax.random.uniform(k, (fan_in, fan_out), jnp.float32, -s, s)

    def bias(k, n):
        return jax.random.uniform(k, (1, n), jnp.float32, -0.05, 0.05)

    return {
        "ln1_w": 1.0 + 0.1 * jax.random.normal(ks[12], (1, D), jnp.float32),
        "ln1_b": 0.1 * jax.random.normal(ks[13], (1, D), jnp.float32),
        "wq": lin(ks[0], D, D), "bq": bias(ks[1], D),
        "wk": lin(ks[2], D, D), "bk": bias(ks[3], D),
        "wv": lin(ks[4], D, D), "bv": bias(ks[5], D),
        "wo": lin(ks[6], D, D), "bo": bias(ks[7], D),
        "ln2_w": 1.0 + 0.1 * jax.random.normal(ks[14], (1, D), jnp.float32),
        "ln2_b": 0.1 * jax.random.normal(ks[15], (1, D), jnp.float32),
        "w1": lin(ks[8], D, I), "b1": bias(ks[9], I),
        "w2": lin(ks[10], I, D), "b2": bias(ks[11], D),
    }


def reference_fp32(x, p):
    """Exact fp32 forward of the PyTorch module (semantic ground truth)."""
    def ln(h, w, b):
        mu = jnp.mean(h, -1, keepdims=True)
        var = jnp.mean((h - mu) ** 2, -1, keepdims=True)
        return (h - mu) * jax.lax.rsqrt(var + LN_EPS) * w + b

    B, S, D = x.shape
    H, Dh = NUM_HEADS, HEAD_DIM
    h = ln(x, p["ln1_w"], p["ln1_b"])
    q = h @ p["wq"] + p["bq"]
    k = h @ p["wk"] + p["bk"]
    v = h @ p["wv"] + p["bv"]

    def split(t):
        return t.reshape(B, S, H, Dh).transpose(0, 2, 1, 3)

    q, k, v = split(q), split(k), split(v)
    s = jnp.einsum("bhqd,bhkd->bhqk", q, k) / math.sqrt(Dh)
    pr = jax.nn.softmax(s, axis=-1)
    o = jnp.einsum("bhqk,bhkd->bhqd", pr, v)
    o = o.transpose(0, 2, 1, 3).reshape(B, S, D)
    o = o @ p["wo"] + p["bo"]
    x1 = x + o
    h2 = ln(x1, p["ln2_w"], p["ln2_b"])
    m = h2 @ p["w1"] + p["b1"]
    m = _gelu_tanh(m)
    m = m @ p["w2"] + p["b2"]
    return x1 + m


def reference_matched(x, pk):
    """Pure-JAX mirror of the kernel math (same bf16 cast points, exact softmax
    division) — tight numerical check of the Pallas implementation."""
    f32, bf16 = jnp.float32, jnp.bfloat16
    B, S, D = x.shape
    H, Dh = NUM_HEADS, HEAD_DIM

    def ln(h, w, b):
        mu = jnp.mean(h, -1, keepdims=True)
        var = jnp.mean((h - mu) ** 2, -1, keepdims=True)
        return (h - mu) * jax.lax.rsqrt(var + LN_EPS) * w + b

    def one(xb):                                   # xb: (S, D)
        h = ln(xb, pk["ln1_w"], pk["ln1_b"])
        qkv = jnp.dot(h.astype(bf16), pk["wqkv"],
                      preferred_element_type=f32) + pk["bqkv"]
        q = qkv[:, :D].astype(bf16).reshape(S, H, Dh)
        k = qkv[:, D:2 * D].astype(bf16).reshape(S, H, Dh)
        v = qkv[:, 2 * D:].astype(bf16).reshape(S, H, Dh)
        s = jnp.einsum("qhd,khd->hqk", q, k, preferred_element_type=f32)
        pr = jax.nn.softmax(s, axis=-1)
        o3 = jnp.einsum("hqk,khd->qhd", pr.astype(bf16), v,
                        preferred_element_type=f32)
        attn = jnp.dot(o3.reshape(S, D).astype(bf16), pk["wo"],
                       preferred_element_type=f32) + pk["bo"]
        x1 = xb + attn
        h2 = ln(x1, pk["ln2_w"], pk["ln2_b"])
        m = jnp.dot(h2.astype(bf16), pk["w1"], preferred_element_type=f32) + pk["b1"]
        m = _gelu_tanh(m)
        m = jnp.dot(m.astype(bf16), pk["w2"], preferred_element_type=f32) + pk["b2"]
        return x1 + m

    return jax.vmap(one)(x)


if __name__ == "__main__":
    key = jax.random.PRNGKey(0)
    kx, kp = jax.random.split(key)
    x = jax.random.normal(kx, (BATCH, SEQ, HIDDEN), jnp.float32)
    params = init_params(kp)

    out = jax.block_until_ready(siglip_encoder_layer(x, params))
    assert out.shape == (BATCH, SEQ, HIDDEN)

    pk = pack_params(params, HEAD_DIM)
    ref_tight = jax.block_until_ready(reference_matched(x, pk))
    ref_exact = jax.block_until_ready(reference_fp32(x, params))

    # Tight check vs a reference with identical bf16-matmul precision; loose
    # sanity check vs the exact fp32 module (difference = bf16 matmul rounding
    # + approximate softmax reciprocal).
    assert jnp.allclose(out, ref_tight, atol=1e-2, rtol=1e-2), \
        f"tight max err {float(jnp.max(jnp.abs(out - ref_tight)))}"
    assert jnp.allclose(out, ref_exact, atol=1e-1, rtol=1e-1), \
        f"fp32 max err {float(jnp.max(jnp.abs(out - ref_exact)))}"
    print("KERNEL_OK")
</pallas_src>

<mosaic_0001>
module attributes {stable_mosaic.version = 11 : i64} {
  func.func @encoder_layer_kernel(%arg0: i32, %arg1: memref<1x16x32xf32, #tpu.memory_space<vmem>>, %arg2: memref<1x32xf32, #tpu.memory_space<vmem>>, %arg3: memref<1x32xf32, #tpu.memory_space<vmem>>, %arg4: memref<32x96xbf16, #tpu.memory_space<vmem>>, %arg5: memref<1x96xf32, #tpu.memory_space<vmem>>, %arg6: memref<32x32xbf16, #tpu.memory_space<vmem>>, %arg7: memref<1x32xf32, #tpu.memory_space<vmem>>, %arg8: memref<1x32xf32, #tpu.memory_space<vmem>>, %arg9: memref<1x32xf32, #tpu.memory_space<vmem>>, %arg10: memref<32x64xbf16, #tpu.memory_space<vmem>>, %arg11: memref<1x64xf32, #tpu.memory_space<vmem>>, %arg12: memref<64x32xbf16, #tpu.memory_space<vmem>>, %arg13: memref<1x32xf32, #tpu.memory_space<vmem>>, %arg14: memref<1x16x32xf32, #tpu.memory_space<vmem>>) attributes {dimension_semantics = [#tpu.dimension_semantics<parallel>], iteration_bounds = array<i64: 2>, scalar_prefetch = 0 : i64, scratch_operands = 0 : i64, tpu.core_type = #tpu.core_type<tc>, window_params = [{transform_indices = @transform_0, window_bounds = array<i64: 1, 16, 32>}, {pipeline_mode = #tpu.pipeline_mode<synchronous>, transform_indices = @transform_1, window_bounds = array<i64: 1, 32>}, {pipeline_mode = #tpu.pipeline_mode<synchronous>, transform_indices = @transform_2, window_bounds = array<i64: 1, 32>}, {pipeline_mode = #tpu.pipeline_mode<synchronous>, transform_indices = @transform_3, window_bounds = array<i64: 32, 96>}, {pipeline_mode = #tpu.pipeline_mode<synchronous>, transform_indices = @transform_4, window_bounds = array<i64: 1, 96>}, {pipeline_mode = #tpu.pipeline_mode<synchronous>, transform_indices = @transform_5, window_bounds = array<i64: 32, 32>}, {pipeline_mode = #tpu.pipeline_mode<synchronous>, transform_indices = @transform_6, window_bounds = array<i64: 1, 32>}, {pipeline_mode = #tpu.pipeline_mode<synchronous>, transform_indices = @transform_7, window_bounds = array<i64: 1, 32>}, {pipeline_mode = #tpu.pipeline_mode<synchronous>, transform_indices = @transform_8, window_bounds = array<i64: 1, 32>}, {pipeline_mode = #tpu.pipeline_mode<synchronous>, transform_indices = @transform_9, window_bounds = array<i64: 32, 64>}, {pipeline_mode = #tpu.pipeline_mode<synchronous>, transform_indices = @transform_10, window_bounds = array<i64: 1, 64>}, {pipeline_mode = #tpu.pipeline_mode<synchronous>, transform_indices = @transform_11, window_bounds = array<i64: 64, 32>}, {pipeline_mode = #tpu.pipeline_mode<synchronous>, transform_indices = @transform_12, window_bounds = array<i64: 1, 32>}, {transform_indices = @transform_13, window_bounds = array<i64: 1, 16, 32>}]} {
    %c0 = arith.constant 0 : index
    %c0_0 = arith.constant 0 : index
    %c0_1 = arith.constant 0 : index
    %0 = vector.load %arg1[%c0, %c0_0, %c0_1] : memref<1x16x32xf32, #tpu.memory_space<vmem>>, vector<1x16x32xf32>
    %1 = vector.shape_cast %0 : vector<1x16x32xf32> to vector<16x32xf32>
    %c0_2 = arith.constant 0 : index
    %c0_3 = arith.constant 0 : index
    %2 = vector.load %arg2[%c0_2, %c0_3] : memref<1x32xf32, #tpu.memory_space<vmem>>, vector<1x32xf32>
    %c0_4 = arith.constant 0 : index
    %c0_5 = arith.constant 0 : index
    %3 = vector.load %arg3[%c0_4, %c0_5] : memref<1x32xf32, #tpu.memory_space<vmem>>, vector<1x32xf32>
    %cst = arith.constant dense<0.000000e+00> : vector<16xf32>
    %4 = vector.multi_reduction <add>, %1, %cst [1] : vector<16x32xf32> to vector<16xf32>
    %5 = vector.shape_cast %4 : vector<16xf32> to vector<16x1xf32>
    %cst_6 = arith.constant 3.200000e+01 : f32
    %6 = vector.broadcast %cst_6 : f32 to vector<16x1xf32>
    %7 = arith.divf %5, %6 : vector<16x1xf32>
    %8 = vector.broadcast %7 : vector<16x1xf32> to vector<16x32xf32>
    %9 = arith.subf %1, %8 : vector<16x32xf32>
    %10 = arith.mulf %9, %9 : vector<16x32xf32>
    %cst_7 = arith.constant dense<0.000000e+00> : vector<16xf32>
    %11 = vector.multi_reduction <add>, %10, %cst_7 [1] : vector<16x32xf32> to vector<16xf32>
    %12 = vector.shape_cast %11 : vector<16xf32> to vector<16x1xf32>
    %cst_8 = arith.constant 3.200000e+01 : f32
    %13 = vector.broadcast %cst_8 : f32 to vector<16x1xf32>
    %14 = arith.divf %12, %13 : vector<16x1xf32>
    %15 = vector.broadcast %7 : vector<16x1xf32> to vector<16x32xf32>
    %16 = arith.subf %1, %15 : vector<16x32xf32>
    %cst_9 = arith.constant 9.99999997E-7 : f32
    %17 = vector.broadcast %cst_9 : f32 to vector<16x1xf32>
    %18 = arith.addf %14, %17 : vector<16x1xf32>
    %19 = math.rsqrt %18 : vector<16x1xf32>
    %20 = vector.broadcast %19 : vector<16x1xf32> to vector<16x32xf32>
    %21 = arith.mulf %16, %20 : vector<16x32xf32>
    %22 = vector.broadcast %2 : vector<1x32xf32> to vector<16x32xf32>
    %23 = arith.mulf %21, %22 : vector<16x32xf32>
    %24 = vector.broadcast %3 : vector<1x32xf32> to vector<16x32xf32>
    %25 = arith.addf %23, %24 : vector<16x32xf32>
    %26 = arith.truncf %25 : vector<16x32xf32> to vector<16x32xbf16>
    %c0_10 = arith.constant 0 : index
    %c0_11 = arith.constant 0 : index
    %27 = vector.load %arg4[%c0_10, %c0_11] : memref<32x96xbf16, #tpu.memory_space<vmem>>, vector<32x96xbf16>
    %cst_12 = arith.constant dense<0.000000e+00> : vector<16x96xf32>
    %28 = tpu.matmul %26, %27, %cst_12 {dimension_numbers = #tpu.dot_dimension_numbers<[1], [0], [0], [1], [0, 0, 1, 1], [], []>} : vector<16x32xbf16>, vector<32x96xbf16>, vector<16x96xf32> -> vector<16x96xf32>
    %c0_13 = arith.constant 0 : index
    %c0_14 = arith.constant 0 : index
    %29 = vector.load %arg5[%c0_13, %c0_14] : memref<1x96xf32, #tpu.memory_space<vmem>>, vector<1x96xf32>
    %30 = vector.broadcast %29 : vector<1x96xf32> to vector<16x96xf32>
    %31 = arith.addf %28, %30 : vector<16x96xf32>
    %32 = vector.extract_strided_slice %31 {offsets = [0, 0], sizes = [16, 32], strides = [1, 1]} : vector<16x96xf32> to vector<16x32xf32>
    %33 = arith.truncf %32 : vector<16x32xf32> to vector<16x32xbf16>
    %34 = vector.shape_cast %33 : vector<16x32xbf16> to vector<16x4x8xbf16>
    %35 = vector.extract_strided_slice %31 {offsets = [0, 32], sizes = [16, 32], strides = [1, 1]} : vector<16x96xf32> to vector<16x32xf32>
    %36 = arith.truncf %35 : vector<16x32xf32> to vector<16x32xbf16>
    %37 = vector.shape_cast %36 : vector<16x32xbf16> to vector<16x4x8xbf16>
    %38 = vector.extract_strided_slice %31 {offsets = [0, 64], sizes = [16, 32], strides = [1, 1]} : vector<16x96xf32> to vector<16x32xf32>
    %39 = arith.truncf %38 : vector<16x32xf32> to vector<16x32xbf16>
    %40 = vector.shape_cast %39 : vector<16x32xbf16> to vector<16x4x8xbf16>
    "tpu.trace_start"() <{level = 10 : i32, message = "qhd,khd->hqk"}> : () -> ()
    %cst_15 = arith.constant dense<0.000000e+00> : vector<4x16x16xf32>
    %41 = tpu.matmul %34, %37, %cst_15 {dimension_numbers = #tpu.dot_dimension_numbers<[2], [2], [0], [0], [0, 1, 0, 0, 1, 0], [1], [1]>} : vector<16x4x8xbf16>, vector<16x4x8xbf16>, vector<4x16x16xf32> -> vector<4x16x16xf32>
    "tpu.trace_stop"() : () -> ()
    %cst_16 = arith.constant dense<0xFF800000> : vector<4x16xf32>
    %42 = vector.multi_reduction <maximumf>, %41, %cst_16 [2] : vector<4x16x16xf32> to vector<4x16xf32>
    %43 = vector.shape_cast %42 : vector<4x16xf32> to vector<4x16x1xf32>
    %44 = vector.broadcast %43 : vector<4x16x1xf32> to vector<4x16x16xf32>
    %45 = arith.subf %41, %44 : vector<4x16x16xf32>
    %46 = math.exp %45 : vector<4x16x16xf32>
    %cst_17 = arith.constant dense<0.000000e+00> : vector<4x16xf32>
    %47 = vector.multi_reduction <add>, %46, %cst_17 [2] : vector<4x16x16xf32> to vector<4x16xf32>
    %48 = vector.shape_cast %47 : vector<4x16xf32> to vector<4x16x1xf32>
    %49 = tpu.reciprocal %48 {approx = true} : vector<4x16x1xf32> -> vector<4x16x1xf32>
    %50 = vector.broadcast %49 : vector<4x16x1xf32> to vector<4x16x16xf32>
    %51 = arith.mulf %46, %50 : vector<4x16x16xf32>
    %52 = arith.truncf %51 : vector<4x16x16xf32> to vector<4x16x16xbf16>
    "tpu.trace_start"() <{level = 10 : i32, message = "hqk,khd->qhd"}> : () -> ()
    %cst_18 = arith.constant dense<0.000000e+00> : vector<4x8x16xf32>
    %53 = tpu.matmul %40, %52, %cst_18 {dimension_numbers = #tpu.dot_dimension_numbers<[0], [2], [2], [1], [0, 1, 0, 2, 1, 1], [1], [0]>} : vector<16x4x8xbf16>, vector<4x16x16xbf16>, vector<4x8x16xf32> -> vector<4x8x16xf32>
    %54 = tpu.transpose %53, [2, 0, 1] : vector<4x8x16xf32> -> vector<16x4x8xf32>
    "tpu.trace_stop"() : () -> ()
    %55 = vector.shape_cast %54 : vector<16x4x8xf32> to vector<16x32xf32>
    %56 = arith.truncf %55 : vector<16x32xf32> to vector<16x32xbf16>
    %c0_19 = arith.constant 0 : index
    %c0_20 = arith.constant 0 : index
    %57 = vector.load %arg6[%c0_19, %c0_20] : memref<32x32xbf16, #tpu.memory_space<vmem>>, vector<32x32xbf16>
    %cst_21 = arith.constant dense<0.000000e+00> : vector<16x32xf32>
    %58 = tpu.matmul %56, %57, %cst_21 {dimension_numbers = #tpu.dot_dimension_numbers<[1], [0], [0], [1], [0, 0, 1, 1], [], []>} : vector<16x32xbf16>, vector<32x32xbf16>, vector<16x32xf32> -> vector<16x32xf32>
    %c0_22 = arith.constant 0 : index
    %c0_23 = arith.constant 0 : index
    %59 = vector.load %arg7[%c0_22, %c0_23] : memref<1x32xf32, #tpu.memory_space<vmem>>, vector<1x32xf32>
    %60 = vector.broadcast %59 : vector<1x32xf32> to vector<16x32xf32>
    %61 = arith.addf %58, %60 : vector<16x32xf32>
    %62 = arith.addf %1, %61 : vector<16x32xf32>
    %c0_24 = arith.constant 0 : index
    %c0_25 = arith.constant 0 : index
    %63 = vector.load %arg8[%c0_24, %c0_25] : memref<1x32xf32, #tpu.memory_space<vmem>>, vector<1x32xf32>
    %c0_26 = arith.constant 0 : index
    %c0_27 = arith.constant 0 : index
    %64 = vector.load %arg9[%c0_26, %c0_27] : memref<1x32xf32, #tpu.memory_space<vmem>>, vector<1x32xf32>
    %cst_28 = arith.constant dense<0.000000e+00> : vector<16xf32>
    %65 = vector.multi_reduction <add>, %62, %cst_28 [1] : vector<16x32xf32> to vector<16xf32>
    %66 = vector.shape_cast %65 : vector<16xf32> to vector<16x1xf32>
    %cst_29 = arith.constant 3.200000e+01 : f32
    %67 = vector.broadcast %cst_29 : f32 to vector<16x1xf32>
    %68 = arith.divf %66, %67 : vector<16x1xf32>
    %69 = vector.broadcast %68 : vector<16x1xf32> to vector<16x32xf32>
    %70 = arith.subf %62, %69 : vector<16x32xf32>
    %71 = arith.mulf %70, %70 : vector<16x32xf32>
    %cst_30 = arith.constant dense<0.000000e+00> : vector<16xf32>
    %72 = vector.multi_reduction <add>, %71, %cst_30 [1] : vector<16x32xf32> to vector<16xf32>
    %73 = vector.shape_cast %72 : vector<16xf32> to vector<16x1xf32>
    %cst_31 = arith.constant 3.200000e+01 : f32
    %74 = vector.broadcast %cst_31 : f32 to vector<16x1xf32>
    %75 = arith.divf %73, %74 : vector<16x1xf32>
    %76 = vector.broadcast %68 : vector<16x1xf32> to vector<16x32xf32>
    %77 = arith.subf %62, %76 : vector<16x32xf32>
    %cst_32 = arith.constant 9.99999997E-7 : f32
    %78 = vector.broadcast %cst_32 : f32 to vector<16x1xf32>
    %79 = arith.addf %75, %78 : vector<16x1xf32>
    %80 = math.rsqrt %79 : vector<16x1xf32>
    %81 = vector.broadcast %80 : vector<16x1xf32> to vector<16x32xf32>
    %82 = arith.mulf %77, %81 : vector<16x32xf32>
    %83 = vector.broadcast %63 : vector<1x32xf32> to vector<16x32xf32>
    %84 = arith.mulf %82, %83 : vector<16x32xf32>
    %85 = vector.broadcast %64 : vector<1x32xf32> to vector<16x32xf32>
    %86 = arith.addf %84, %85 : vector<16x32xf32>
    %87 = arith.truncf %86 : vector<16x32xf32> to vector<16x32xbf16>
    %c0_33 = arith.constant 0 : index
    %c0_34 = arith.constant 0 : index
    %88 = vector.load %arg10[%c0_33, %c0_34] : memref<32x64xbf16, #tpu.memory_space<vmem>>, vector<32x64xbf16>
    %cst_35 = arith.constant dense<0.000000e+00> : vector<16x64xf32>
    %89 = tpu.matmul %87, %88, %cst_35 {dimension_numbers = #tpu.dot_dimension_numbers<[1], [0], [0], [1], [0, 0, 1, 1], [], []>} : vector<16x32xbf16>, vector<32x64xbf16>, vector<16x64xf32> -> vector<16x64xf32>
    %c0_36 = arith.constant 0 : index
    %c0_37 = arith.constant 0 : index
    %90 = vector.load %arg11[%c0_36, %c0_37] : memref<1x64xf32, #tpu.memory_space<vmem>>, vector<1x64xf32>
    %91 = vector.broadcast %90 : vector<1x64xf32> to vector<16x64xf32>
    %92 = arith.addf %89, %91 : vector<16x64xf32>
    %cst_38 = arith.constant 5.000000e-01 : f32
    %93 = vector.broadcast %cst_38 : f32 to vector<16x64xf32>
    %94 = arith.mulf %93, %92 : vector<16x64xf32>
    %cst_39 = arith.constant 4.471500e-02 : f32
    %95 = vector.broadcast %cst_39 : f32 to vector<16x64xf32>
    %96 = arith.mulf %95, %92 : vector<16x64xf32>
    %97 = arith.mulf %96, %92 : vector<16x64xf32>
    %98 = arith.mulf %97, %92 : vector<16x64xf32>
    %99 = arith.addf %92, %98 : vector<16x64xf32>
    %cst_40 = arith.constant 0.797884583 : f32
    %100 = vector.broadcast %cst_40 : f32 to vector<16x64xf32>
    %101 = arith.mulf %100, %99 : vector<16x64xf32>
    %102 = math.tanh %101 : vector<16x64xf32>
    %cst_41 = arith.constant 1.000000e+00 : f32
    %103 = vector.broadcast %cst_41 : f32 to vector<16x64xf32>
    %104 = arith.addf %103, %102 : vector<16x64xf32>
    %105 = arith.mulf %94, %104 : vector<16x64xf32>
    %106 = arith.truncf %105 : vector<16x64xf32> to vector<16x64xbf16>
    %c0_42 = arith.constant 0 : index
    %c0_43 = arith.constant 0 : index
    %107 = vector.load %arg12[%c0_42, %c0_43] : memref<64x32xbf16, #tpu.memory_space<vmem>>, vector<64x32xbf16>
    %cst_44 = arith.constant dense<0.000000e+00> : vector<16x32xf32>
    %108 = tpu.matmul %106, %107, %cst_44 {dimension_numbers = #tpu.dot_dimension_numbers<[1], [0], [0], [1], [0, 0, 1, 1], [], []>} : vector<16x64xbf16>, vector<64x32xbf16>, vector<16x32xf32> -> vector<16x32xf32>
    %c0_45 = arith.constant 0 : index
    %c0_46 = arith.constant 0 : index
    %109 = vector.load %arg13[%c0_45, %c0_46] : memref<1x32xf32, #tpu.memory_space<vmem>>, vector<1x32xf32>
    %110 = vector.broadcast %109 : vector<1x32xf32> to vector<16x32xf32>
    %111 = arith.addf %108, %110 : vector<16x32xf32>
    %112 = arith.addf %62, %111 : vector<16x32xf32>
    %c0_47 = arith.constant 0 : index
    %c0_48 = arith.constant 0 : index
    %c0_49 = arith.constant 0 : index
    %113 = vector.load %arg14[%c0_47, %c0_48, %c0_49] : memref<1x16x32xf32, #tpu.memory_space<vmem>>, vector<1x16x32xf32>
    %114 = vector.shape_cast %113 : vector<1x16x32xf32> to vector<16x32xf32>
    %115 = vector.shape_cast %112 : vector<16x32xf32> to vector<1x16x32xf32>
    tpu.vector_store %arg14[%c0_47, %c0_48, %c0_49], %115 {strides = array<i32>} : memref<1x16x32xf32, #tpu.memory_space<vmem>>, vector<1x16x32xf32>,
    return
  }
  func.func @transform_0(%arg0: i32) -> (i32, i32, i32) {
    %c0_i32 = arith.constant 0 : i32
    %c0_i32_0 = arith.constant 0 : i32
    %c0_i32_1 = arith.constant 0 : i32
    return %arg0, %c0_i32, %c0_i32_0 : i32, i32, i32
  }
  func.func @transform_1(%arg0: i32) -> (i32, i32) {
    %c0_i32 = arith.constant 0 : i32
    %c0_i32_0 = arith.constant 0 : i32
    %c0_i32_1 = arith.constant 0 : i32
    return %c0_i32, %c0_i32_0 : i32, i32
  }
  func.func @transform_2(%arg0: i32) -> (i32, i32) {
    %c0_i32 = arith.constant 0 : i32
    %c0_i32_0 = arith.constant 0 : i32
    %c0_i32_1 = arith.constant 0 : i32
    return %c0_i32, %c0_i32_0 : i32, i32
  }
  func.func @transform_3(%arg0: i32) -> (i32, i32) {
    %c0_i32 = arith.constant 0 : i32
    %c0_i32_0 = arith.constant 0 : i32
    %c0_i32_1 = arith.constant 0 : i32
    return %c0_i32, %c0_i32_0 : i32, i32
  }
  func.func @transform_4(%arg0: i32) -> (i32, i32) {
    %c0_i32 = arith.constant 0 : i32
    %c0_i32_0 = arith.constant 0 : i32
    %c0_i32_1 = arith.constant 0 : i32
    return %c0_i32, %c0_i32_0 : i32, i32
  }
  func.func @transform_5(%arg0: i32) -> (i32, i32) {
    %c0_i32 = arith.constant 0 : i32
    %c0_i32_0 = arith.constant 0 : i32
    %c0_i32_1 = arith.constant 0 : i32
    return %c0_i32, %c0_i32_0 : i32, i32
  }
  func.func @transform_6(%arg0: i32) -> (i32, i32) {
    %c0_i32 = arith.constant 0 : i32
    %c0_i32_0 = arith.constant 0 : i32
    %c0_i32_1 = arith.constant 0 : i32
    return %c0_i32, %c0_i32_0 : i32, i32
  }
  func.func @transform_7(%arg0: i32) -> (i32, i32) {
    %c0_i32 = arith.constant 0 : i32
    %c0_i32_0 = arith.constant 0 : i32
    %c0_i32_1 = arith.constant 0 : i32
    return %c0_i32, %c0_i32_0 : i32, i32
  }
  func.func @transform_8(%arg0: i32) -> (i32, i32) {
    %c0_i32 = arith.constant 0 : i32
    %c0_i32_0 = arith.constant 0 : i32
    %c0_i32_1 = arith.constant 0 : i32
    return %c0_i32, %c0_i32_0 : i32, i32
  }
  func.func @transform_9(%arg0: i32) -> (i32, i32) {
    %c0_i32 = arith.constant 0 : i32
    %c0_i32_0 = arith.constant 0 : i32
    %c0_i32_1 = arith.constant 0 : i32
    return %c0_i32, %c0_i32_0 : i32, i32
  }
  func.func @transform_10(%arg0: i32) -> (i32, i32) {
    %c0_i32 = arith.constant 0 : i32
    %c0_i32_0 = arith.constant 0 : i32
    %c0_i32_1 = arith.constant 0 : i32
    return %c0_i32, %c0_i32_0 : i32, i32
  }
  func.func @transform_11(%arg0: i32) -> (i32, i32) {
    %c0_i32 = arith.constant 0 : i32
    %c0_i32_0 = arith.constant 0 : i32
    %c0_i32_1 = arith.constant 0 : i32
    return %c0_i32, %c0_i32_0 : i32, i32
  }
  func.func @transform_12(%arg0: i32) -> (i32, i32) {
    %c0_i32 = arith.constant 0 : i32
    %c0_i32_0 = arith.constant 0 : i32
    %c0_i32_1 = arith.constant 0 : i32
    return %c0_i32, %c0_i32_0 : i32, i32
  }
  func.func @transform_13(%arg0: i32) -> (i32, i32, i32) {
    %c0_i32 = arith.constant 0 : i32
    %c0_i32_0 = arith.constant 0 : i32
    %c0_i32_1 = arith.constant 0 : i32
    return %arg0, %c0_i32, %c0_i32_0 : i32, i32, i32
  }
}

</mosaic_0001>

<llo_original>
// kernel: tpu_custom_call.1
$region0: #{tpu_custom_call.1}
  #allocation0 [shape = 'u32[]', space=smem, size = 0x4, offset = 0x4, fixed_abs, tag = 'smem constant byte address 0x4 - core index']
  #allocation1 [shape = 'u32[144,128]{1,0:T(1,128)}', space=vmem, size = 0x12000, scoped, tag = 'internal scratch']
  %s0 = inlined_call_operand.vmem [shape: f32[2,16,32], index: 0, kind: input, shape index: {}]
  %s1 = inlined_call_operand.vmem [shape: f32[1,32], index: 1, kind: input, shape index: {}]
  %s2 = inlined_call_operand.vmem [shape: f32[1,32], index: 2, kind: input, shape index: {}]
  %s3 = inlined_call_operand.vmem [shape: bf16[32,96], index: 3, kind: input, shape index: {}]
  %s4 = inlined_call_operand.hbm [shape: f32[1,96], index: 4, kind: input, shape index: {}]
  %s5 = inlined_call_operand.hbm [shape: bf16[32,32], index: 5, kind: input, shape index: {}]
  %s6 = inlined_call_operand.hbm [shape: f32[1,32], index: 6, kind: input, shape index: {}]
  %s7 = inlined_call_operand.hbm [shape: f32[1,32], index: 7, kind: input, shape index: {}]
  %s8 = inlined_call_operand.hbm [shape: f32[1,32], index: 8, kind: input, shape index: {}]
  %s9 = inlined_call_operand.vmem [shape: bf16[32,64], index: 9, kind: input, shape index: {}]
  %s10 = inlined_call_operand.vmem [shape: f32[1,64], index: 10, kind: input, shape index: {}]
  %s11 = inlined_call_operand.vmem [shape: bf16[64,32], index: 11, kind: input, shape index: {}]
  %s12 = inlined_call_operand.vmem [shape: f32[1,32], index: 12, kind: input, shape index: {}]
  %s13 = inlined_call_operand.hbm [shape: f32[2,16,32], index: 13, kind: output, shape index: {}]
  %s14 = sld [smem:[#allocation0]]
  $region105: #{tpu_custom_call.1} parent=0
    _
  %s16 = ssub.s32 1, %s14
  %s17 = scalar_select 0, %s16, %s14
  $region1: #{tpu_custom_call.1} parent=0
    #allocation2 [shape = 'u8[512]{0}', space=vmem, size = 0x400, scoped, tag = 'input window, operand 4, single buffered']
    #allocation3 [shape = 's32[2]{0}', space=sflag, size = 0x8, scoped, tag = 'scoped memory for tpu_custom_call.1']
    #allocation4 [shape = 's32[2]{0}', space=sflag, size = 0x8, scoped, tag = 'scoped memory for tpu_custom_call.1']
    #allocation5 [shape = 'u8[8192]{0}', space=vmem, size = 0x2000, scoped, tag = 'input window, operand 5, single buffered']
    #allocation6 [shape = 's32[1]{0}', space=sflag, size = 0x4, scoped, tag = 'scoped memory for tpu_custom_call.1']
    #allocation7 [shape = 'u8[512]{0}', space=vmem, size = 0x400, scoped, tag = 'input window, operand 6, single buffered']
    #allocation8 [shape = 'u8[512]{0}', space=vmem, size = 0x400, scoped, tag = 'input window, operand 7, single buffered']
    #allocation9 [shape = 's32[1]{0}', space=sflag, size = 0x4, scoped, tag = 'scoped memory for tpu_custom_call.1']
    #allocation10 [shape = 'u8[512]{0}', space=vmem, size = 0x400, scoped, tag = 'input window, operand 8, single buffered']
    #allocation11 [shape = 'u8[16384]{0}', space=vmem, size = 0x4000, scoped, tag = 'output window, operand 0']
    %18 = vsyncpa [#allocation3], 0
    %19 = vsyncpa [#allocation6], 0
    %20 = vsyncpa [#allocation9], 0
    %21 = vsyncpa [#allocation4], 0
    %s22 = scalar_lea.sflag [#allocation4], 1
    %23 = vsyncpa %s22, 0
    loop: start=0, step=1, limit=4
    $region2: #{tpu_custom_call.1} parent=1 // loop_pre_header
      _
    $region3: #{tpu_custom_call.1} parent=1 // loop_header
      %s25 = sphi 0, %s29
      %p26 = scmp.ge.s32.totalorder %s25, 4
      %s35 = sphi 0, %s37
      %s38 = sphi 0, %s35
      %s39 = sphi 0, %s38
      %s55 = sphi 0, %s39
      %s59 = sphi 0, %s59
      %s61 = sphi 0, %s59
      %s62 = sphi 0, %s61
      %s76 = sphi 0, %s62
      %s80 = sphi 0, %s80
      %s82 = sphi 0, %s80
      %s83 = sphi 0, %s82
      %s97 = sphi 0, %s83
      %s101 = sphi 0, %s101
      %s103 = sphi 0, %s101
      %s104 = sphi 0, %s103
      %s118 = sphi 0, %s104
      %s122 = sphi 0, %s122
      %s124 = sphi 0, %s122
      %s125 = sphi 0, %s124
      %s139 = sphi 0, %s125
      %s143 = sphi 0, %s143
      %s145 = sphi 0, %s143
      %s146 = sphi 0, %s145
      %s160 = sphi 0, %s146
      %s164 = sphi 0, %s164
      %s166 = sphi 0, %s164
      %s167 = sphi 0, %s166
      %s181 = sphi 0, %s167
      %s185 = sphi 0, %s185
      %s187 = sphi 0, %s185
      %s188 = sphi 0, %s187
      %s202 = sphi 0, %s188
      %s206 = sphi 0, %s206
      %s208 = sphi 0, %s206
      %s209 = sphi 0, %s208
      %s223 = sphi 0, %s209
      %s227 = sphi 0, %s227
      %s229 = sphi 0, %s227
      %s230 = sphi 0, %s229
      %s244 = sphi 0, %s230
      %s248 = sphi 0, %s248
      %s250 = sphi 0, %s248
      %s251 = sphi 0, %s250
      %s265 = sphi 0, %s251
      %s269 = sphi 0, %s269
      %s271 = sphi 0, %s269
      %s272 = sphi 0, %s271
      %s286 = sphi 0, %s272
      %s290 = sphi 0, %s290
      %s292 = sphi 0, %s290
      %s293 = sphi 0, %s292
      %s307 = sphi 0, %s293
      %s313 = sphi 0, %s315
      %s316 = sphi 0, %s313
      %s317 = sphi 0, %s316
      %s333 = sphi 0, %s317
    $region4: #{tpu_custom_call.1} parent=1 // loop_header_branch
      %28 = sbr.rel (%p26) target = $region8
    $region5: #{tpu_custom_call.1} parent=1 // loop_body
      %s30 = ssub.s32 %s25, 1
      %s31 = ssub.s32 %s25, 2
      %s32 = sadd.s32 %s25, 1
      %s33 = ssub.s32 %s25, %s32
      %p34 = scmp.eq.s32.totalorder %s33, 0
      %s36 = sadd.s32 %s35, 1
      %s37 = scalar_select %p34, %s35, %s36
      %p40 = pneg %p34
      %p41 = scmp.eq.s32.totalorder %s25, 1
      %p42 = por %p40, %p41
      %p43 = scmp.ne.s32.totalorder %s35, %s38
      %p44 = scmp.eq.s32.totalorder %s25, 0
      %p45 = por %p43, %p44
      %p46 = scmp.ne.s32.totalorder %s35, %s38
      %p47 = scmp.eq.s32.totalorder %s30, 1
      %p48 = por %p46, %p47
      %p49 = scmp.ne.s32.totalorder %s38, %s39
      %p50 = scmp.eq.s32.totalorder %s30, 0
      %p51 = por %p49, %p50
      %p52 = scmp.ne.s32.totalorder %s38, %s39
      %p53 = scmp.eq.s32.totalorder %s31, 1
      %p54 = por %p52, %p53
      %p56 = scmp.ne.s32.totalorder %s39, %s55
      %p57 = scmp.eq.s32.totalorder %s31, 0
      %p58 = por %p56, %p57
      %s60 = sadd.s32 %s59, 1
      %p63 = scmp.eq.s32.totalorder %s25, 1
      %p64 = scmp.ne.s32.totalorder %s59, %s61
      %p65 = scmp.eq.s32.totalorder %s25, 0
      %p66 = por %p64, %p65
      %p67 = scmp.ne.s32.totalorder %s59, %s61
      %p68 = scmp.eq.s32.totalorder %s30, 1
      %p69 = por %p67, %p68
      %p70 = scmp.ne.s32.totalorder %s61, %s62
      %p71 = scmp.eq.s32.totalorder %s30, 0
      %p72 = por %p70, %p71
      %p73 = scmp.ne.s32.totalorder %s61, %s62
      %p74 = scmp.eq.s32.totalorder %s31, 1
      %p75 = por %p73, %p74
      %p77 = scmp.ne.s32.totalorder %s62, %s76
      %p78 = scmp.eq.s32.totalorder %s31, 0
      %p79 = por %p77, %p78
      %s81 = sadd.s32 %s80, 1
      %p84 = scmp.eq.s32.totalorder %s25, 1
      %p85 = scmp.ne.s32.totalorder %s80, %s82
      %p86 = scmp.eq.s32.totalorder %s25, 0
      %p87 = por %p85, %p86
      %p88 = scmp.ne.s32.totalorder %s80, %s82
      %p89 = scmp.eq.s32.totalorder %s30, 1
      %p90 = por %p88, %p89
      %p91 = scmp.ne.s32.totalorder %s82, %s83
      %p92 = scmp.eq.s32.totalorder %s30, 0
      %p93 = por %p91, %p92
      %p94 = scmp.ne.s32.totalorder %s82, %s83
      %p95 = scmp.eq.s32.totalorder %s31, 1
      %p96 = por %p94, %p95
      %p98 = scmp.ne.s32.totalorder %s83, %s97
      %p99 = scmp.eq.s32.totalorder %s31, 0
      %p100 = por %p98, %p99
      %s102 = sadd.s32 %s101, 1
      %p105 = scmp.eq.s32.totalorder %s25, 1
      %p106 = scmp.ne.s32.totalorder %s101, %s103
      %p107 = scmp.eq.s32.totalorder %s25, 0
      %p108 = por %p106, %p107
      %p109 = scmp.ne.s32.totalorder %s101, %s103
      %p110 = scmp.eq.s32.totalorder %s30, 1
      %p111 = por %p109, %p110
      %p112 = scmp.ne.s32.totalorder %s103, %s104
      %p113 = scmp.eq.s32.totalorder %s30, 0
      %p114 = por %p112, %p113
      %p115 = scmp.ne.s32.totalorder %s103, %s104
      %p116 = scmp.eq.s32.totalorder %s31, 1
      %p117 = por %p115, %p116
      %p119 = scmp.ne.s32.totalorder %s104, %s118
      %p120 = scmp.eq.s32.totalorder %s31, 0
      %p121 = por %p119, %p120
      %s123 = sadd.s32 %s122, 1
      %p126 = scmp.eq.s32.totalorder %s25, 1
      %p127 = scmp.ne.s32.totalorder %s122, %s124
      %p128 = scmp.eq.s32.totalorder %s25, 0
      %p129 = por %p127, %p128
      %p130 = scmp.ne.s32.totalorder %s122, %s124
      %p131 = scmp.eq.s32.totalorder %s30, 1
      %p132 = por %p130, %p131
      %p133 = scmp.ne.s32.totalorder %s124, %s125
      %p134 = scmp.eq.s32.totalorder %s30, 0
      %p135 = por %p133, %p134
      %p136 = scmp.ne.s32.totalorder %s124, %s125
      %p137 = scmp.eq.s32.totalorder %s31, 1
      %p138 = por %p136, %p137
      %p140 = scmp.ne.s32.totalorder %s125, %s139
      %p141 = scmp.eq.s32.totalorder %s31, 0
      %p142 = por %p140, %p141
      %s144 = sadd.s32 %s143, 1
      %p147 = scmp.eq.s32.totalorder %s25, 1
      %p148 = scmp.ne.s32.totalorder %s143, %s145
      %p149 = scmp.eq.s32.totalorder %s25, 0
      %p150 = por %p148, %p149
      %p151 = scmp.ne.s32.totalorder %s143, %s145
      %p152 = scmp.eq.s32.totalorder %s30, 1
      %p153 = por %p151, %p152
      %p154 = scmp.ne.s32.totalorder %s145, %s146
      %p155 = scmp.eq.s32.totalorder %s30, 0
      %p156 = por %p154, %p155
      %p157 = scmp.ne.s32.totalorder %s145, %s146
      %p158 = scmp.eq.s32.totalorder %s31, 1
      %p159 = por %p157, %p158
      %p161 = scmp.ne.s32.totalorder %s146, %s160
      %p162 = scmp.eq.s32.totalorder %s31, 0
      %p163 = por %p161, %p162
      %s165 = sadd.s32 %s164, 1
      %p168 = scmp.eq.s32.totalorder %s25, 1
      %p169 = scmp.ne.s32.totalorder %s164, %s166
      %p170 = scmp.eq.s32.totalorder %s25, 0
      %p171 = por %p169, %p170
      %p172 = scmp.ne.s32.totalorder %s164, %s166
      %p173 = scmp.eq.s32.totalorder %s30, 1
      %p174 = por %p172, %p173
      %p175 = scmp.ne.s32.totalorder %s166, %s167
      %p176 = scmp.eq.s32.totalorder %s30, 0
      %p177 = por %p175, %p176
      %p178 = scmp.ne.s32.totalorder %s166, %s167
      %p179 = scmp.eq.s32.totalorder %s31, 1
      %p180 = por %p178, %p179
      %p182 = scmp.ne.s32.totalorder %s167, %s181
      %p183 = scmp.eq.s32.totalorder %s31, 0
      %p184 = por %p182, %p183
      %s186 = sadd.s32 %s185, 1
      %p189 = scmp.eq.s32.totalorder %s25, 1
      %p190 = scmp.ne.s32.totalorder %s185, %s187
      %p191 = scmp.eq.s32.totalorder %s25, 0
      %p192 = por %p190, %p191
      %p193 = scmp.ne.s32.totalorder %s185, %s187
      %p194 = scmp.eq.s32.totalorder %s30, 1
      %p195 = por %p193, %p194
      %p196 = scmp.ne.s32.totalorder %s187, %s188
      %p197 = scmp.eq.s32.totalorder %s30, 0
      %p198 = por %p196, %p197
      %p199 = scmp.ne.s32.totalorder %s187, %s188
      %p200 = scmp.eq.s32.totalorder %s31, 1
      %p201 = por %p199, %p200
      %p203 = scmp.ne.s32.totalorder %s188, %s202
      %p204 = scmp.eq.s32.totalorder %s31, 0
      %p205 = por %p203, %p204
      %s207 = sadd.s32 %s206, 1
      %p210 = scmp.eq.s32.totalorder %s25, 1
      %p211 = scmp.ne.s32.totalorder %s206, %s208
      %p212 = scmp.eq.s32.totalorder %s25, 0
      %p213 = por %p211, %p212
      %p214 = scmp.ne.s32.totalorder %s206, %s208
      %p215 = scmp.eq.s32.totalorder %s30, 1
      %p216 = por %p214, %p215
      %p217 = scmp.ne.s32.totalorder %s208, %s209
      %p218 = scmp.eq.s32.totalorder %s30, 0
      %p219 = por %p217, %p218
      %p220 = scmp.ne.s32.totalorder %s208, %s209
      %p221 = scmp.eq.s32.totalorder %s31, 1
      %p222 = por %p220, %p221
      %p224 = scmp.ne.s32.totalorder %s209, %s223
      %p225 = scmp.eq.s32.totalorder %s31, 0
      %p226 = por %p224, %p225
      %s228 = sadd.s32 %s227, 1
      %p231 = scmp.eq.s32.totalorder %s25, 1
      %p232 = scmp.ne.s32.totalorder %s227, %s229
      %p233 = scmp.eq.s32.totalorder %s25, 0
      %p234 = por %p232, %p233
      %p235 = scmp.ne.s32.totalorder %s227, %s229
      %p236 = scmp.eq.s32.totalorder %s30, 1
      %p237 = por %p235, %p236
      %p238 = scmp.ne.s32.totalorder %s229, %s230
      %p239 = scmp.eq.s32.totalorder %s30, 0
      %p240 = por %p238, %p239
      %p241 = scmp.ne.s32.totalorder %s229, %s230
      %p242 = scmp.eq.s32.totalorder %s31, 1
      %p243 = por %p241, %p242
      %p245 = scmp.ne.s32.totalorder %s230, %s244
      %p246 = scmp.eq.s32.totalorder %s31, 0
      %p247 = por %p245, %p246
      %s249 = sadd.s32 %s248, 1
      %p252 = scmp.eq.s32.totalorder %s25, 1
      %p253 = scmp.ne.s32.totalorder %s248, %s250
      %p254 = scmp.eq.s32.totalorder %s25, 0
      %p255 = por %p253, %p254
      %p256 = scmp.ne.s32.totalorder %s248, %s250
      %p257 = scmp.eq.s32.totalorder %s30, 1
      %p258 = por %p256, %p257
      %p259 = scmp.ne.s32.totalorder %s250, %s251
      %p260 = scmp.eq.s32.totalorder %s30, 0
      %p261 = por %p259, %p260
      %p262 = scmp.ne.s32.totalorder %s250, %s251
      %p263 = scmp.eq.s32.totalorder %s31, 1
      %p264 = por %p262, %p263
      %p266 = scmp.ne.s32.totalorder %s251, %s265
      %p267 = scmp.eq.s32.totalorder %s31, 0
      %p268 = por %p266, %p267
      %s270 = sadd.s32 %s269, 1
      %p273 = scmp.eq.s32.totalorder %s25, 1
      %p274 = scmp.ne.s32.totalorder %s269, %s271
      %p275 = scmp.eq.s32.totalorder %s25, 0
      %p276 = por %p274, %p275
      %p277 = scmp.ne.s32.totalorder %s269, %s271
      %p278 = scmp.eq.s32.totalorder %s30, 1
      %p279 = por %p277, %p278
      %p280 = scmp.ne.s32.totalorder %s271, %s272
      %p281 = scmp.eq.s32.totalorder %s30, 0
      %p282 = por %p280, %p281
      %p283 = scmp.ne.s32.totalorder %s271, %s272
      %p284 = scmp.eq.s32.totalorder %s31, 1
      %p285 = por %p283, %p284
      %p287 = scmp.ne.s32.totalorder %s272, %s286
      %p288 = scmp.eq.s32.totalorder %s31, 0
      %p289 = por %p287, %p288
      %s291 = sadd.s32 %s290, 1
      %p294 = scmp.eq.s32.totalorder %s25, 1
      %p295 = scmp.ne.s32.totalorder %s290, %s292
      %p296 = scmp.eq.s32.totalorder %s25, 0
      %p297 = por %p295, %p296
      %p298 = scmp.ne.s32.totalorder %s290, %s292
      %p299 = scmp.eq.s32.totalorder %s30, 1
      %p300 = por %p298, %p299
      %p301 = scmp.ne.s32.totalorder %s292, %s293
      %p302 = scmp.eq.s32.totalorder %s30, 0
      %p303 = por %p301, %p302
      %p304 = scmp.ne.s32.totalorder %s292, %s293
      %p305 = scmp.eq.s32.totalorder %s31, 1
      %p306 = por %p304, %p305
      %p308 = scmp.ne.s32.totalorder %s293, %s307
      %p309 = scmp.eq.s32.totalorder %s31, 0
      %p310 = por %p308, %p309
      %s311 = ssub.s32 %s25, %s32
      %p312 = scmp.eq.s32.totalorder %s311, 0
      %s314 = sadd.s32 %s313, 1
      %s315 = scalar_select %p312, %s313, %s314
      %p318 = pneg %p312
      %p319 = scmp.eq.s32.totalorder %s25, 1
      %p320 = por %p318, %p319
      %p321 = scmp.ne.s32.totalorder %s313, %s316
      %p322 = scmp.eq.s32.totalorder %s25, 0
      %p323 = por %p321, %p322
      %p324 = scmp.ne.s32.totalorder %s313, %s316
      %p325 = scmp.eq.s32.totalorder %s30, 1
      %p326 = por %p324, %p325
      %p327 = scmp.ne.s32.totalorder %s316, %s317
      %p328 = scmp.eq.s32.totalorder %s30, 0
      %p329 = por %p327, %p328
      %p330 = scmp.ne.s32.totalorder %s316, %s317
      %p331 = scmp.eq.s32.totalorder %s31, 1
      %p332 = por %p330, %p331
      %p334 = scmp.ne.s32.totalorder %s317, %s333
      %p335 = scmp.eq.s32.totalorder %s31, 0
      %p336 = por %p334, %p335
      %p337 = scmp.le.s32.totalorder 1, %s25
      %p338 = scmp.lt.s32.totalorder %s25, 3
      %p339 = pnand %p337, %p338
      %p340 = pneg %p339
      // Predicated region
      $region9: #{tpu_custom_call.1} parent=5 // pred_check
        _
      $region10: #{tpu_custom_call.1} parent=5 // pred_check_branch
        %342 = sbr.rel (%p339) target = $region12
      $region11: #{tpu_custom_call.1} parent=5 // pred_region
        %s343 = ssub.s32 %s25, 1
        // Predicated region
        $region13: #{tpu_custom_call.1} parent=11 // pred_check
          %p344 = pneg %p72
        $region14: #{tpu_custom_call.1} parent=11 // pred_check_branch
          %346 = sbr.rel (%p344) target = $region16
        $region15: #{tpu_custom_call.1} parent=11 // pred_region
          _
        $region16: #{tpu_custom_call.1} parent=11 // pred_fallthru
          _
        // Predicated region
        $region17: #{tpu_custom_call.1} parent=11 // pred_check
          %p347 = pneg %p93
        $region18: #{tpu_custom_call.1} parent=11 // pred_check_branch
          %349 = sbr.rel (%p347) target = $region20
        $region19: #{tpu_custom_call.1} parent=11 // pred_region
          _
        $region20: #{tpu_custom_call.1} parent=11 // pred_fallthru
          _
        // Predicated region
        $region21: #{tpu_custom_call.1} parent=11 // pred_check
          %p350 = pneg %p114
        $region22: #{tpu_custom_call.1} parent=11 // pred_check_branch
          %352 = sbr.rel (%p350) target = $region24
        $region23: #{tpu_custom_call.1} parent=11 // pred_region
          _
        $region24: #{tpu_custom_call.1} parent=11 // pred_fallthru
          _
        // Predicated region
        $region25: #{tpu_custom_call.1} parent=11 // pred_check
          %p353 = pneg %p135
        $region26: #{tpu_custom_call.1} parent=11 // pred_check_branch
          %355 = sbr.rel (%p353) target = $region28
        $region27: #{tpu_custom_call.1} parent=11 // pred_region
          %s357 = ssub.s32 16, 16
          %358 = vsyncadd [#allocation3], %s357
          %s360 = sshll.u32 [#allocation2], 4
          %s361 = int_to_ptr.vmem [resolvable:$true] %s360
          %363 = dma.hbm_to_vmem [thread:$0]  %s4, 16, %s361, [#allocation3]
        $region28: #{tpu_custom_call.1} parent=11 // pred_fallthru
          _
        // Predicated region
        $region29: #{tpu_custom_call.1} parent=11 // pred_check
          %p364 = pneg %p156
        $region30: #{tpu_custom_call.1} parent=11 // pred_check_branch
          %366 = sbr.rel (%p364) target = $region32
        $region31: #{tpu_custom_call.1} parent=11 // pred_region
          %s368 = ssub.s32 256, 256
          %369 = vsyncadd [#allocation6], %s368
          %s370 = sshll.u32 [#allocation5], 4
          %s371 = int_to_ptr.vmem [resolvable:$true] %s370
          %376 = dma.hbm_to_vmem [thread:$0]  %s5, 256, %s371, [#allocation6], 64, 64, 4
        $region32: #{tpu_custom_call.1} parent=11 // pred_fallthru
          _
        // Predicated region
        $region33: #{tpu_custom_call.1} parent=11 // pred_check
          %p377 = pneg %p177
        $region34: #{tpu_custom_call.1} parent=11 // pred_check_branch
          %379 = sbr.rel (%p377) target = $region36
        $region35: #{tpu_custom_call.1} parent=11 // pred_region
          %s381 = ssub.s32 16, 16
          %382 = vsyncadd [#allocation6], %s381
          %s384 = sshll.u32 [#allocation7], 4
          %s385 = int_to_ptr.vmem [resolvable:$true] %s384
          %387 = dma.hbm_to_vmem [thread:$0]  %s6, 16, %s385, [#allocation6]
        $region36: #{tpu_custom_call.1} parent=11 // pred_fallthru
          _
        // Predicated region
        $region37: #{tpu_custom_call.1} parent=11 // pred_check
          %p388 = pneg %p198
        $region38: #{tpu_custom_call.1} parent=11 // pred_check_branch
          %390 = sbr.rel (%p388) target = $region40
        $region39: #{tpu_custom_call.1} parent=11 // pred_region
          %s392 = ssub.s32 16, 16
          %393 = vsyncadd [#allocation9], %s392
          %s395 = sshll.u32 [#allocation8], 4
          %s396 = int_to_ptr.vmem [resolvable:$true] %s395
          %398 = dma.hbm_to_vmem [thread:$0]  %s7, 16, %s396, [#allocation9]
        $region40: #{tpu_custom_call.1} parent=11 // pred_fallthru
          _
        // Predicated region
        $region41: #{tpu_custom_call.1} parent=11 // pred_check
          %p399 = pneg %p219
        $region42: #{tpu_custom_call.1} parent=11 // pred_check_branch
          %401 = sbr.rel (%p399) target = $region44
        $region43: #{tpu_custom_call.1} parent=11 // pred_region
          %s403 = ssub.s32 16, 16
          %404 = vsyncadd [#allocation9], %s403
          %s406 = sshll.u32 [#allocation10], 4
          %s407 = int_to_ptr.vmem [resolvable:$true] %s406
          %409 = dma.hbm_to_vmem [thread:$0]  %s8, 16, %s407, [#allocation9]
        $region44: #{tpu_custom_call.1} parent=11 // pred_fallthru
          _
        // Predicated region
        $region45: #{tpu_custom_call.1} parent=11 // pred_check
          %p410 = pneg %p240
        $region46: #{tpu_custom_call.1} parent=11 // pred_check_branch
          %412 = sbr.rel (%p410) target = $region48
        $region47: #{tpu_custom_call.1} parent=11 // pred_region
          _
        $region48: #{tpu_custom_call.1} parent=11 // pred_fallthru
          _
        // Predicated region
        $region49: #{tpu_custom_call.1} parent=11 // pred_check
          %p413 = pneg %p261
        $region50: #{tpu_custom_call.1} parent=11 // pred_check_branch
          %415 = sbr.rel (%p413) target = $region52
        $region51: #{tpu_custom_call.1} parent=11 // pred_region
          _
        $region52: #{tpu_custom_call.1} parent=11 // pred_fallthru
          _
        // Predicated region
        $region53: #{tpu_custom_call.1} parent=11 // pred_check
          %p416 = pneg %p282
        $region54: #{tpu_custom_call.1} parent=11 // pred_check_branch
          %418 = sbr.rel (%p416) target = $region56
        $region55: #{tpu_custom_call.1} parent=11 // pred_region
          _
        $region56: #{tpu_custom_call.1} parent=11 // pred_fallthru
          _
        // Predicated region
        $region57: #{tpu_custom_call.1} parent=11 // pred_check
          %p419 = pneg %p303
        $region58: #{tpu_custom_call.1} parent=11 // pred_check_branch
          %421 = sbr.rel (%p419) target = $region60
        $region59: #{tpu_custom_call.1} parent=11 // pred_region
          _
        $region60: #{tpu_custom_call.1} parent=11 // pred_fallthru
          _
      $region12: #{tpu_custom_call.1} parent=5 // pred_fallthru
        _
      %p422 = scmp.lt.s32.totalorder %s25, 2
      // Predicated region
      $region61: #{tpu_custom_call.1} parent=5 // pred_check
        %p423 = pneg %p422
      $region62: #{tpu_custom_call.1} parent=5 // pred_check_branch
        %425 = sbr.rel (%p423) target = $region64
      $region63: #{tpu_custom_call.1} parent=5 // pred_region
        // Predicated region
        $region65: #{tpu_custom_call.1} parent=63 // pred_check
          %p426 = pneg %p45
        $region66: #{tpu_custom_call.1} parent=63 // pred_check_branch
          %428 = sbr.rel (%p426) target = $region68
        $region67: #{tpu_custom_call.1} parent=63 // pred_region
          %p429 = scmp.lt.s32.totalorder %s25, 1
          %s430 = scalar_select %p429, %s25, 1
          %s431 = smul.addr %s430, 2
          %s432 = smul.addr %s431, 8
          %s433 = scalar_lea.vmem %s0, %s432
        $region68: #{tpu_custom_call.1} parent=63 // pred_fallthru
          _
      $region64: #{tpu_custom_call.1} parent=5 // pred_fallthru
        _
      %p434 = scmp.le.s32.totalorder 1, %s25
      %p435 = scmp.lt.s32.totalorder %s25, 3
      %p436 = pnand %p434, %p435
      %p437 = pneg %p436
      // Predicated region
      $region69: #{tpu_custom_call.1} parent=5 // pred_check
        _
      $region70: #{tpu_custom_call.1} parent=5 // pred_check_branch
        %439 = sbr.rel (%p436) target = $region72
      $region71: #{tpu_custom_call.1} parent=5 // pred_region
        %s440 = ssub.s32 %s25, 1
        // Predicated region
        $region73: #{tpu_custom_call.1} parent=71 // pred_check
          %p441 = pneg %p135
        $region74: #{tpu_custom_call.1} parent=71 // pred_check_branch
          %443 = sbr.rel (%p441) target = $region76
        $region75: #{tpu_custom_call.1} parent=71 // pred_region
          %444 = dma.done [#allocation3], 16
        $region76: #{tpu_custom_call.1} parent=71 // pred_fallthru
          _
        // Predicated region
        $region77: #{tpu_custom_call.1} parent=71 // pred_check
          %p445 = pneg %p156
        $region78: #{tpu_custom_call.1} parent=71 // pred_check_branch
          %447 = sbr.rel (%p445) target = $region80
        $region79: #{tpu_custom_call.1} parent=71 // pred_region
          %448 = dma.done [#allocation6], 256
        $region80: #{tpu_custom_call.1} parent=71 // pred_fallthru
          _
        // Predicated region
        $region81: #{tpu_custom_call.1} parent=71 // pred_check
          %p449 = pneg %p177
        $region82: #{tpu_custom_call.1} parent=71 // pred_check_branch
          %451 = sbr.rel (%p449) target = $region84
        $region83: #{tpu_custom_call.1} parent=71 // pred_region
          %452 = dma.done [#allocation6], 16
        $region84: #{tpu_custom_call.1} parent=71 // pred_fallthru
          _
        // Predicated region
        $region85: #{tpu_custom_call.1} parent=71 // pred_check
          %p453 = pneg %p198
        $region86: #{tpu_custom_call.1} parent=71 // pred_check_branch
          %455 = sbr.rel (%p453) target = $region88
        $region87: #{tpu_custom_call.1} parent=71 // pred_region
          %456 = dma.done [#allocation9], 16
        $region88: #{tpu_custom_call.1} parent=71 // pred_fallthru
          _
        // Predicated region
        $region89: #{tpu_custom_call.1} parent=71 // pred_check
          %p457 = pneg %p219
        $region90: #{tpu_custom_call.1} parent=71 // pred_check_branch
          %459 = sbr.rel (%p457) target = $region92
        $region91: #{tpu_custom_call.1} parent=71 // pred_region
          %460 = dma.done [#allocation9], 16
        $region92: #{tpu_custom_call.1} parent=71 // pred_fallthru
          _
        %p461 = scmp.lt.s32.totalorder %s30, 1
        %s462 = scalar_select %p461, %s30, 1
        %s463 = smul.addr %s462, 2
        %s464 = smul.addr %s463, 8
        %s465 = scalar_lea.vmem %s0, %s464
        %p466 = pneg %p51
        %p467 = pneg %p48
        %p468 = pneg %p72
        %p469 = pneg %p69
        %p470 = pneg %p93
        %p471 = pneg %p90
        %p472 = pneg %p114
        %p473 = pneg %p111
        %p474 = pneg %p135
        %p475 = pneg %p132
        %p476 = pneg %p156
        %p477 = pneg %p153
        %p478 = pneg %p177
        %p479 = pneg %p174
        %p480 = pneg %p198
        %p481 = pneg %p195
        %p482 = pneg %p219
        %p483 = pneg %p216
        %p484 = pneg %p240
        %p485 = pneg %p237
        %p486 = pneg %p261
        %p487 = pneg %p258
        %p488 = pneg %p282
        %p489 = pneg %p279
        %p490 = pneg %p303
        %p491 = pneg %p300
        %p492 = pneg %p329
        %p493 = pneg %p326
        %s494 = sand.u32 %s316, 1
        %s495 = scalar_lea.sflag [#allocation4], %s494
        %s496 = sand.u32 %s316, 1
        %s497 = smul.addr %s496, 16
        %s498 = scalar_lea.vmem [#allocation11], %s497
        %p499 = scmp.lt.s32.totalorder %s30, 1
        %s500 = scalar_select %p499, %s30, 1
        %s501 = smul.addr %s500, 2
        %s502 = smul.addr %s501, 8
        %s503 = scalar_lea.vmem %s0, %s502
        %v505 = vld [vmem:[%s503] sm:$0xff]
        %v506 = vld [vmem:[%s503 + $0x8] sm:$0xff]
        %v507 = vld [vmem:[%s1] sm:$0x1]
        %v508 = vld [vmem:[%s2] sm:$0x1]
        %vm509 = vcmask 261120
        %v510 = vsel %vm509, %v505, 0.0
        %511 = vadd.xlane.f32.xlu0 %v510
        %v512 = vpop.xlane.xlu0 %511
        %v513 = vsel %vm509, %v506, 0.0
        %514 = vadd.xlane.f32.xlu0 %v513
        %v515 = vpop.xlane.xlu0 %514
        %v516 = vrcp.pop 32.0
        %v517 = vmul.f32 %v512, %v516
        %v518 = vmul.f32 %v515, %v516
        %v519 = vsub.f32 %v505, %v517
        %v520 = vsub.f32 %v506, %v518
        %v521 = vmul.f32 %v519, %v519
        %v522 = vmul.f32 %v520, %v520
        %v523 = vsel %vm509, %v521, 0.0
        %524 = vadd.xlane.f32.xlu0 %v523
        %v525 = vpop.xlane.xlu0 %524
        %v526 = vsel %vm509, %v522, 0.0
        %527 = vadd.xlane.f32.xlu0 %v526
        %v528 = vpop.xlane.xlu0 %527
        %v529 = vmul.f32 %v525, %v516
        %v530 = vmul.f32 %v528, %v516
        %v531 = vadd.f32 %v529, 1e-06
        %v532 = vadd.f32 %v530, 1e-06
        %v533 = vrsqrt.pop %v531
        %v534 = vrsqrt.pop %v532
        %v535 = vmul.f32 %v519, %v533
        %v536 = vmul.f32 %v520, %v534
        %v538 = vlaneseq
        %v539 = vshrl.u32 %v538, 7
        %v540 = vsub.s32 0, %v539
        %v541 = vrot.slane %v507, %v540
        %v543 = vmul.f32 %v535, %v541
        %v544 = vmul.f32 %v536, %v541
        %v546 = vlaneseq
        %v547 = vshrl.u32 %v546, 7
        %v548 = vsub.s32 0, %v547
        %v549 = vrot.slane %v508, %v548
        %v551 = vadd.f32 %v543, %v549
        %v552 = vadd.f32 %v544, %v549
        %v553 = vpack.c.bf16 %v552, %v551
        %v554 = vld [vmem:[%s3] sm:$0xf]
        %v555 = vld [vmem:[%s3 + $0x4] sm:$0xf]
        %v556 = vld [vmem:[%s3 + $0x8] sm:$0xf]
        %v557 = vld [vmem:[%s3 + $0xc] sm:$0xf]
        %v558 = vld [vmem:[#allocation2] sm:$0x1]
        %v560 = vlaneseq
        %v561 = vshrl.u32 %v560, 7
        %v562 = vsub.s32 0, %v561
        %v563 = vrot.slane %v558, %v562
        %v569 = vunpack.c.l.b16 %v554
        %v570 = vunpack.c.l.b16 %v555
        %v571 = vunpack.c.l.b16 %v556
        %v572 = vunpack.c.l.b16 %v557
        %v573 = vpack.c.b16 %v570, %v569
        %v574 = vpack.c.b16 %v572, %v571
        %v578 = vsel %vm509, %v553, 0
        %580 = vmatprep.subr.bf16.mxu0 0
        %581 = vmatpush1.bf16.msra.mxu0 %v573
        %582 = vmatprep.subr.bf16.mxu0 0
        %583 = vmatpush1.bf16.msra.mxu0 %v574
        %584 = vmatprep.subr.bf16.mxu0 0
        %585 = vmatpush1.bf16.msra.mxu0 0
        %586 = vmatprep.subr.bf16.mxu0 0
        %587 = vmatpush1.bf16.msra.mxu0 0
        %588 = vmatprep.subr.bf16.mxu0 0
        %589 = vmatpush1.bf16.msra.mxu0 0
        %590 = vmatprep.subr.bf16.mxu0 0
        %591 = vmatpush1.bf16.msra.mxu0 0
        %592 = vmatprep.subr.bf16.mxu0 0
        %593 = vmatpush1.bf16.msra.mxu0 0
        %594 = vmatprep.subr.bf16.mxu0 0
        %595 = vmatpush1.bf16.msra.mxu0 0
        %596 = vmatprep.subr.bf16.mxu0 0
        %597 = vmatpush1.bf16.msra.mxu0 0
        %598 = vmatprep.subr.bf16.mxu0 0
        %599 = vmatpush1.bf16.msra.mxu0 0
        %600 = vmatprep.subr.bf16.mxu0 0
        %601 = vmatpush1.bf16.msra.mxu0 0
        %602 = vmatprep.subr.bf16.mxu0 0
        %603 = vmatpush1.bf16.msra.mxu0 0
        %604 = vmatprep.subr.bf16.mxu0 0
        %605 = vmatpush1.bf16.msra.mxu0 0
        %606 = vmatprep.subr.bf16.mxu0 0
        %607 = vmatpush1.bf16.msra.mxu0 0
        %608 = vmatprep.subr.bf16.mxu0 0
        %609 = vmatpush1.bf16.msra.mxu0 0
        %610 = vmatprep.subr.bf16.mxu0 0
        %611 = vmatpush1.bf16.msra.mxu0 0
        %612 = vmatprep.mubr.bf16.mxu0 0
        %613 = vmatmul.mubr.bf16.gmra.mrb[0].mxu0 %v578
        %v614 = vpop.f32.mrb[0].mxu0
        %v615 = vadd.f32 %v563, %v614
        %v616 = vpop.f32.mrb[0].mxu0
        %v617 = vpop.f32.mrb[0].mxu0
        %v618 = vadd.f32 %v563, %v617
        %v619 = vpop.f32.mrb[0].mxu0
        %620 = vdwg.mxu0
        %v621 = vpack.c.bf16 %v618, %v615
        %623 = vrot.lane.b32.xlu0 %v621, 120
        %v624 = vpop.permute.xlu0 %623
        %625 = vrot.lane.b32.xlu0 %v621, 112
        %v626 = vpop.permute.xlu0 %625
        %627 = vrot.lane.b32.xlu0 %v621, 104
        %v628 = vpop.permute.xlu0 %627
        %629 = vrot.lane.b32.xlu0 %v621, 96
        %v630 = vpop.permute.xlu0 %629
        %631 = vrot.lane.b32.xlu0 %v624, 96
        %v632 = vpop.permute.xlu0 %631
        %633 = vrot.lane.b32.xlu0 %v626, 96
        %v634 = vpop.permute.xlu0 %633
        %635 = vrot.lane.b32.xlu0 %v628, 96
        %v636 = vpop.permute.xlu0 %635
        %641 = vxpose.xlu0.c.b16.start [1/8] %v630, 128
        %642 = vxpose.xlu0.c.b16.cont [2/8] 0, 128
        %643 = vxpose.xlu0.c.b16.cont [3/8] 0, 128
        %644 = vxpose.xlu0.c.b16.cont [4/8] 0, 128
        %645 = vxpose.xlu0.c.b16.cont [5/8] 0, 128
        %646 = vxpose.xlu0.c.b16.cont [6/8] 0, 128
        %647 = vxpose.xlu0.c.b16.cont [7/8] 0, 128
        %648 = vxpose.xlu0.c.b16.end [8/8] 0, 128
        %v649 = vpop.trf.xlu0
        %v650 = vpop.trf.xlu0
        %v651 = vpop.trf.xlu0
        %v652 = vpop.trf.xlu0
        %v653 = vpop.trf.xlu0
        %v654 = vpop.trf.xlu0
        %v655 = vpop.trf.xlu0
        %v656 = vpop.trf.xlu0
        %657 = vxpose.xlu0.c.b16.start [1/8] %v632, 128
        %658 = vxpose.xlu0.c.b16.cont [2/8] 0, 128
        %659 = vxpose.xlu0.c.b16.cont [3/8] 0, 128
        %660 = vxpose.xlu0.c.b16.cont [4/8] 0, 128
        %661 = vxpose.xlu0.c.b16.cont [5/8] 0, 128
        %662 = vxpose.xlu0.c.b16.cont [6/8] 0, 128
        %663 = vxpose.xlu0.c.b16.cont [7/8] 0, 128
        %664 = vxpose.xlu0.c.b16.end [8/8] 0, 128
        %v665 = vpop.trf.xlu0
        %v666 = vpop.trf.xlu0
        %v667 = vpop.trf.xlu0
        %v668 = vpop.trf.xlu0
        %v669 = vpop.trf.xlu0
        %v670 = vpop.trf.xlu0
        %v671 = vpop.trf.xlu0
        %v672 = vpop.trf.xlu0
        %673 = vxpose.xlu0.c.b16.start [1/8] %v634, 128
        %674 = vxpose.xlu0.c.b16.cont [2/8] 0, 128
        %675 = vxpose.xlu0.c.b16.cont [3/8] 0, 128
        %676 = vxpose.xlu0.c.b16.cont [4/8] 0, 128
        %677 = vxpose.xlu0.c.b16.cont [5/8] 0, 128
        %678 = vxpose.xlu0.c.b16.cont [6/8] 0, 128
        %679 = vxpose.xlu0.c.b16.cont [7/8] 0, 128
        %680 = vxpose.xlu0.c.b16.end [8/8] 0, 128
        %v681 = vpop.trf.xlu0
        %v682 = vpop.trf.xlu0
        %v683 = vpop.trf.xlu0
        %v684 = vpop.trf.xlu0
        %v685 = vpop.trf.xlu0
        %v686 = vpop.trf.xlu0
        %v687 = vpop.trf.xlu0
        %v688 = vpop.trf.xlu0
        %689 = vxpose.xlu0.c.b16.start [1/8] %v636, 128
        %690 = vxpose.xlu0.c.b16.cont [2/8] 0, 128
        %691 = vxpose.xlu0.c.b16.cont [3/8] 0, 128
        %692 = vxpose.xlu0.c.b16.cont [4/8] 0, 128
        %693 = vxpose.xlu0.c.b16.cont [5/8] 0, 128
        %694 = vxpose.xlu0.c.b16.cont [6/8] 0, 128
        %695 = vxpose.xlu0.c.b16.cont [7/8] 0, 128
        %696 = vxpose.xlu0.c.b16.end [8/8] 0, 128
        %v697 = vpop.trf.xlu0
        %v698 = vpop.trf.xlu0
        %v699 = vpop.trf.xlu0
        %v700 = vpop.trf.xlu0
        %v701 = vpop.trf.xlu0
        %v702 = vpop.trf.xlu0
        %v703 = vpop.trf.xlu0
        %v704 = vpop.trf.xlu0
        %vm705 = vcmask 64512
        %v707 = vsel %vm705, %v621, 0
        %vm709 = vcmask 1043456
        %v711 = vsel %vm709, %v649, 0
        %713 = vmatprep.subr.bf16.mxu0 0
        %714 = vmatpush1.bf16.msra.mxu0 %v711
        %715 = vmatprep.subr.bf16.mxu0 0
        %716 = vmatpush1.bf16.msra.mxu0 0
        %717 = vmatprep.subr.bf16.mxu0 0
        %718 = vmatpush1.bf16.msra.mxu0 0
        %719 = vmatprep.subr.bf16.mxu0 0
        %720 = vmatpush1.bf16.msra.mxu0 0
        %721 = vmatprep.subr.bf16.mxu0 0
        %722 = vmatpush1.bf16.msra.mxu0 0
        %723 = vmatprep.subr.bf16.mxu0 0
        %724 = vmatpush1.bf16.msra.mxu0 0
        %725 = vmatprep.subr.bf16.mxu0 0
        %726 = vmatpush1.bf16.msra.mxu0 0
        %727 = vmatprep.subr.bf16.mxu0 0
        %728 = vmatpush1.bf16.msra.mxu0 0
        %729 = vmatprep.subr.bf16.mxu0 0
        %730 = vmatpush1.bf16.msra.mxu0 0
        %731 = vmatprep.subr.bf16.mxu0 0
        %732 = vmatpush1.bf16.msra.mxu0 0
        %733 = vmatprep.subr.bf16.mxu0 0
        %734 = vmatpush1.bf16.msra.mxu0 0
        %735 = vmatprep.subr.bf16.mxu0 0
        %736 = vmatpush1.bf16.msra.mxu0 0
        %737 = vmatprep.subr.bf16.mxu0 0
        %738 = vmatpush1.bf16.msra.mxu0 0
        %739 = vmatprep.subr.bf16.mxu0 0
        %740 = vmatpush1.bf16.msra.mxu0 0
        %741 = vmatprep.subr.bf16.mxu0 0
        %742 = vmatpush1.bf16.msra.mxu0 0
        %743 = vmatprep.subr.bf16.mxu0 0
        %744 = vmatpush1.bf16.msra.mxu0 0
        %745 = vmatprep.mubr.bf16.mxu0 0
        %746 = vmatmul.mubr.bf16.gmra.mrb[0].mxu0 %v707
        %v747 = vpop.f32.mrb[0].mxu0
        %v748 = vadd.f32 0.0, %v747
        %v749 = vpop.f32.mrb[0].mxu0
        %v750 = vpop.f32.mrb[0].mxu0
        %v751 = vadd.f32 0.0, %v750
        %v752 = vpop.f32.mrb[0].mxu0
        %753 = vdwg.mxu0
        %v755 = vsel %vm705, %v624, 0
        %v758 = vsel %vm709, %v665, 0
        %760 = vmatprep.subr.bf16.mxu0 0
        %761 = vmatpush1.bf16.msra.mxu0 %v758
        %762 = vmatprep.subr.bf16.mxu0 0
        %763 = vmatpush1.bf16.msra.mxu0 0
        %764 = vmatprep.subr.bf16.mxu0 0
        %765 = vmatpush1.bf16.msra.mxu0 0
        %766 = vmatprep.subr.bf16.mxu0 0
        %767 = vmatpush1.bf16.msra.mxu0 0
        %768 = vmatprep.subr.bf16.mxu0 0
        %769 = vmatpush1.bf16.msra.mxu0 0
        %770 = vmatprep.subr.bf16.mxu0 0
        %771 = vmatpush1.bf16.msra.mxu0 0
        %772 = vmatprep.subr.bf16.mxu0 0
        %773 = vmatpush1.bf16.msra.mxu0 0
        %774 = vmatprep.subr.bf16.mxu0 0
        %775 = vmatpush1.bf16.msra.mxu0 0
        %776 = vmatprep.subr.bf16.mxu0 0
        %777 = vmatpush1.bf16.msra.mxu0 0
        %778 = vmatprep.subr.bf16.mxu0 0
        %779 = vmatpush1.bf16.msra.mxu0 0
        %780 = vmatprep.subr.bf16.mxu0 0
        %781 = vmatpush1.bf16.msra.mxu0 0
        %782 = vmatprep.subr.bf16.mxu0 0
        %783 = vmatpush1.bf16.msra.mxu0 0
        %784 = vmatprep.subr.bf16.mxu0 0
        %785 = vmatpush1.bf16.msra.mxu0 0
        %786 = vmatprep.subr.bf16.mxu0 0
        %787 = vmatpush1.bf16.msra.mxu0 0
        %788 = vmatprep.subr.bf16.mxu0 0
        %789 = vmatpush1.bf16.msra.mxu0 0
        %790 = vmatprep.subr.bf16.mxu0 0
        %791 = vmatpush1.bf16.msra.mxu0 0
        %792 = vmatprep.mubr.bf16.mxu0 0
        %793 = vmatmul.mubr.bf16.gmra.mrb[0].mxu0 %v755
        %v794 = vpop.f32.mrb[0].mxu0
        %v795 = vadd.f32 0.0, %v794
        %v796 = vpop.f32.mrb[0].mxu0
        %v797 = vpop.f32.mrb[0].mxu0
        %v798 = vadd.f32 0.0, %v797
        %v799 = vpop.f32.mrb[0].mxu0
        %800 = vdwg.mxu0
        %v802 = vsel %vm705, %v626, 0
        %v805 = vsel %vm709, %v681, 0
        %807 = vmatprep.subr.bf16.mxu0 0
        %808 = vmatpush1.bf16.msra.mxu0 %v805
        %809 = vmatprep.subr.bf16.mxu0 0
        %810 = vmatpush1.bf16.msra.mxu0 0
        %811 = vmatprep.subr.bf16.mxu0 0
        %812 = vmatpush1.bf16.msra.mxu0 0
        %813 = vmatprep.subr.bf16.mxu0 0
        %814 = vmatpush1.bf16.msra.mxu0 0
        %815 = vmatprep.subr.bf16.mxu0 0
        %816 = vmatpush1.bf16.msra.mxu0 0
        %817 = vmatprep.subr.bf16.mxu0 0
        %818 = vmatpush1.bf16.msra.mxu0 0
        %819 = vmatprep.subr.bf16.mxu0 0
        %820 = vmatpush1.bf16.msra.mxu0 0
        %821 = vmatprep.subr.bf16.mxu0 0
        %822 = vmatpush1.bf16.msra.mxu0 0
        %823 = vmatprep.subr.bf16.mxu0 0
        %824 = vmatpush1.bf16.msra.mxu0 0
        %825 = vmatprep.subr.bf16.mxu0 0
        %826 = vmatpush1.bf16.msra.mxu0 0
        %827 = vmatprep.subr.bf16.mxu0 0
        %828 = vmatpush1.bf16.msra.mxu0 0
        %829 = vmatprep.subr.bf16.mxu0 0
        %830 = vmatpush1.bf16.msra.mxu0 0
        %831 = vmatprep.subr.bf16.mxu0 0
        %832 = vmatpush1.bf16.msra.mxu0 0
        %833 = vmatprep.subr.bf16.mxu0 0
        %834 = vmatpush1.bf16.msra.mxu0 0
        %835 = vmatprep.subr.bf16.mxu0 0
        %836 = vmatpush1.bf16.msra.mxu0 0
        %837 = vmatprep.subr.bf16.mxu0 0
        %838 = vmatpush1.bf16.msra.mxu0 0
        %839 = vmatprep.mubr.bf16.mxu0 0
        %840 = vmatmul.mubr.bf16.gmra.mrb[0].mxu0 %v802
        %v841 = vpop.f32.mrb[0].mxu0
        %v842 = vadd.f32 0.0, %v841
        %v843 = vpop.f32.mrb[0].mxu0
        %v844 = vpop.f32.mrb[0].mxu0
        %v845 = vadd.f32 0.0, %v844
        %v846 = vpop.f32.mrb[0].mxu0
        %847 = vdwg.mxu0
        %v849 = vsel %vm705, %v628, 0
        %v852 = vsel %vm709, %v697, 0
        %854 = vmatprep.subr.bf16.mxu0 0
        %855 = vmatpush1.bf16.msra.mxu0 %v852
        %856 = vmatprep.subr.bf16.mxu0 0
        %857 = vmatpush1.bf16.msra.mxu0 0
        %858 = vmatprep.subr.bf16.mxu0 0
        %859 = vmatpush1.bf16.msra.mxu0 0
        %860 = vmatprep.subr.bf16.mxu0 0
        %861 = vmatpush1.bf16.msra.mxu0 0
        %862 = vmatprep.subr.bf16.mxu0 0
        %863 = vmatpush1.bf16.msra.mxu0 0
        %864 = vmatprep.subr.bf16.mxu0 0
        %865 = vmatpush1.bf16.msra.mxu0 0
        %866 = vmatprep.subr.bf16.mxu0 0
        %867 = vmatpush1.bf16.msra.mxu0 0
        %868 = vmatprep.subr.bf16.mxu0 0
        %869 = vmatpush1.bf16.msra.mxu0 0
        %870 = vmatprep.subr.bf16.mxu0 0
        %871 = vmatpush1.bf16.msra.mxu0 0
        %872 = vmatprep.subr.bf16.mxu0 0
        %873 = vmatpush1.bf16.msra.mxu0 0
        %874 = vmatprep.subr.bf16.mxu0 0
        %875 = vmatpush1.bf16.msra.mxu0 0
        %876 = vmatprep.subr.bf16.mxu0 0
        %877 = vmatpush1.bf16.msra.mxu0 0
        %878 = vmatprep.subr.bf16.mxu0 0
        %879 = vmatpush1.bf16.msra.mxu0 0
        %880 = vmatprep.subr.bf16.mxu0 0
        %881 = vmatpush1.bf16.msra.mxu0 0
        %882 = vmatprep.subr.bf16.mxu0 0
        %883 = vmatpush1.bf16.msra.mxu0 0
        %884 = vmatprep.subr.bf16.mxu0 0
        %885 = vmatpush1.bf16.msra.mxu0 0
        %886 = vmatprep.mubr.bf16.mxu0 0
        %887 = vmatmul.mubr.bf16.gmra.mrb[0].mxu0 %v849
        %v888 = vpop.f32.mrb[0].mxu0
        %v889 = vadd.f32 0.0, %v888
        %v890 = vpop.f32.mrb[0].mxu0
        %v891 = vpop.f32.mrb[0].mxu0
        %v892 = vadd.f32 0.0, %v891
        %v893 = vpop.f32.mrb[0].mxu0
        %894 = vdwg.mxu0
        %vm895 = vcmask 130048
        %v896 = vsel %vm895, %v748, -inf
        %897 = vmax.xlane.f32.xlu0 %v896
        %v898 = vpop.xlane.xlu0 %897
        %v899 = vsel %vm895, %v751, -inf
        %900 = vmax.xlane.f32.xlu0 %v899
        %v901 = vpop.xlane.xlu0 %900
        %v902 = vsel %vm895, %v795, -inf
        %903 = vmax.xlane.f32.xlu0 %v902
        %v904 = vpop.xlane.xlu0 %903
        %v905 = vsel %vm895, %v798, -inf
        %906 = vmax.xlane.f32.xlu0 %v905
        %v907 = vpop.xlane.xlu0 %906
        %v908 = vsel %vm895, %v842, -inf
        %909 = vmax.xlane.f32.xlu0 %v908
        %v910 = vpop.xlane.xlu0 %909
        %v911 = vsel %vm895, %v845, -inf
        %912 = vmax.xlane.f32.xlu0 %v911
        %v913 = vpop.xlane.xlu0 %912
        %v914 = vsel %vm895, %v889, -inf
        %915 = vmax.xlane.f32.xlu0 %v914
        %v916 = vpop.xlane.xlu0 %915
        %v917 = vsel %vm895, %v892, -inf
        %918 = vmax.xlane.f32.xlu0 %v917
        %v919 = vpop.xlane.xlu0 %918
        %v920 = vsub.f32 %v748, %v898
        %v921 = vsub.f32 %v751, %v901
        %v922 = vsub.f32 %v795, %v904
        %v923 = vsub.f32 %v798, %v907
        %v924 = vsub.f32 %v842, %v910
        %v925 = vsub.f32 %v845, %v913
        %v926 = vsub.f32 %v889, %v916
        %v927 = vsub.f32 %v892, %v919
        %v928 = vmul.f32 %v920, 1.442695
        %v929 = vpow.pop %v928
        %v930 = vmul.f32 %v921, 1.442695
        %v931 = vpow.pop %v930
        %v932 = vmul.f32 %v922, 1.442695
        %v933 = vpow.pop %v932
        %v934 = vmul.f32 %v923, 1.442695
        %v935 = vpow.pop %v934
        %v936 = vmul.f32 %v924, 1.442695
        %v937 = vpow.pop %v936
        %v938 = vmul.f32 %v925, 1.442695
        %v939 = vpow.pop %v938
        %v940 = vmul.f32 %v926, 1.442695
        %v941 = vpow.pop %v940
        %v942 = vmul.f32 %v927, 1.442695
        %v943 = vpow.pop %v942
        %v944 = vsel %vm895, %v929, 0.0
        %945 = vadd.xlane.f32.xlu0 %v944
        %v946 = vpop.xlane.xlu0 %945
        %v947 = vsel %vm895, %v931, 0.0
        %948 = vadd.xlane.f32.xlu0 %v947
        %v949 = vpop.xlane.xlu0 %948
        %v950 = vsel %vm895, %v933, 0.0
        %951 = vadd.xlane.f32.xlu0 %v950
        %v952 = vpop.xlane.xlu0 %951
        %v953 = vsel %vm895, %v935, 0.0
        %954 = vadd.xlane.f32.xlu0 %v953
        %v955 = vpop.xlane.xlu0 %954
        %v956 = vsel %vm895, %v937, 0.0
        %957 = vadd.xlane.f32.xlu0 %v956
        %v958 = vpop.xlane.xlu0 %957
        %v959 = vsel %vm895, %v939, 0.0
        %960 = vadd.xlane.f32.xlu0 %v959
        %v961 = vpop.xlane.xlu0 %960
        %v962 = vsel %vm895, %v941, 0.0
        %963 = vadd.xlane.f32.xlu0 %v962
        %v964 = vpop.xlane.xlu0 %963
        %v965 = vsel %vm895, %v943, 0.0
        %966 = vadd.xlane.f32.xlu0 %v965
        %v967 = vpop.xlane.xlu0 %966
        %v968 = vrcp.pop %v946
        %v969 = vrcp.pop %v949
        %v970 = vrcp.pop %v952
        %v971 = vrcp.pop %v955
        %v972 = vrcp.pop %v958
        %v973 = vrcp.pop %v961
        %v974 = vrcp.pop %v964
        %v975 = vrcp.pop %v967
        %v976 = vmul.f32 %v929, %v968
        %v977 = vmul.f32 %v931, %v969
        %v978 = vmul.f32 %v933, %v970
        %v979 = vmul.f32 %v935, %v971
        %v980 = vmul.f32 %v937, %v972
        %v981 = vmul.f32 %v939, %v973
        %v982 = vmul.f32 %v941, %v974
        %v983 = vmul.f32 %v943, %v975
        %v984 = vpack.c.bf16 %v977, %v976
        %v985 = vpack.c.bf16 %v979, %v978
        %v986 = vpack.c.bf16 %v981, %v980
        %v987 = vpack.c.bf16 %v983, %v982
        %988 = vrot.lane.b32.xlu0 %v621, 64
        %v989 = vpop.permute.xlu0 %988
        %990 = vrot.lane.b32.xlu0 %v624, 64
        %v991 = vpop.permute.xlu0 %990
        %992 = vrot.lane.b32.xlu0 %v626, 64
        %v993 = vpop.permute.xlu0 %992
        %994 = vrot.lane.b32.xlu0 %v628, 64
        %v995 = vpop.permute.xlu0 %994
        %1000 = vxpose.xlu0.c.b16.start [1/8] %v989, 128
        %1001 = vxpose.xlu0.c.b16.cont [2/8] 0, 128
        %1002 = vxpose.xlu0.c.b16.cont [3/8] 0, 128
        %1003 = vxpose.xlu0.c.b16.cont [4/8] 0, 128
        %1004 = vxpose.xlu0.c.b16.cont [5/8] 0, 128
        %1005 = vxpose.xlu0.c.b16.cont [6/8] 0, 128
        %1006 = vxpose.xlu0.c.b16.cont [7/8] 0, 128
        %1007 = vxpose.xlu0.c.b16.end [8/8] 0, 128
        %v1008 = vpop.trf.xlu0
        %v1009 = vpop.trf.xlu0
        %v1010 = vpop.trf.xlu0
        %v1011 = vpop.trf.xlu0
        %v1012 = vpop.trf.xlu0
        %v1013 = vpop.trf.xlu0
        %v1014 = vpop.trf.xlu0
        %v1015 = vpop.trf.xlu0
        %1016 = vxpose.xlu0.c.b16.start [1/8] %v991, 128
        %1017 = vxpose.xlu0.c.b16.cont [2/8] 0, 128
        %1018 = vxpose.xlu0.c.b16.cont [3/8] 0, 128
        %1019 = vxpose.xlu0.c.b16.cont [4/8] 0, 128
        %1020 = vxpose.xlu0.c.b16.cont [5/8] 0, 128
        %1021 = vxpose.xlu0.c.b16.cont [6/8] 0, 128
        %1022 = vxpose.xlu0.c.b16.cont [7/8] 0, 128
        %1023 = vxpose.xlu0.c.b16.end [8/8] 0, 128
        %v1024 = vpop.trf.xlu0
        %v1025 = vpop.trf.xlu0
        %v1026 = vpop.trf.xlu0
        %v1027 = vpop.trf.xlu0
        %v1028 = vpop.trf.xlu0
        %v1029 = vpop.trf.xlu0
        %v1030 = vpop.trf.xlu0
        %v1031 = vpop.trf.xlu0
        %1032 = vxpose.xlu0.c.b16.start [1/8] %v993, 128
        %1033 = vxpose.xlu0.c.b16.cont [2/8] 0, 128
        %1034 = vxpose.xlu0.c.b16.cont [3/8] 0, 128
        %1035 = vxpose.xlu0.c.b16.cont [4/8] 0, 128
        %1036 = vxpose.xlu0.c.b16.cont [5/8] 0, 128
        %1037 = vxpose.xlu0.c.b16.cont [6/8] 0, 128
        %1038 = vxpose.xlu0.c.b16.cont [7/8] 0, 128
        %1039 = vxpose.xlu0.c.b16.end [8/8] 0, 128
        %v1040 = vpop.trf.xlu0
        %v1041 = vpop.trf.xlu0
        %v1042 = vpop.trf.xlu0
        %v1043 = vpop.trf.xlu0
        %v1044 = vpop.trf.xlu0
        %v1045 = vpop.trf.xlu0
        %v1046 = vpop.trf.xlu0
        %v1047 = vpop.trf.xlu0
        %1048 = vxpose.xlu0.c.b16.start [1/8] %v995, 128
        %1049 = vxpose.xlu0.c.b16.cont [2/8] 0, 128
        %1050 = vxpose.xlu0.c.b16.cont [3/8] 0, 128
        %1051 = vxpose.xlu0.c.b16.cont [4/8] 0, 128
        %1052 = vxpose.xlu0.c.b16.cont [5/8] 0, 128
        %1053 = vxpose.xlu0.c.b16.cont [6/8] 0, 128
        %1054 = vxpose.xlu0.c.b16.cont [7/8] 0, 128
        %1055 = vxpose.xlu0.c.b16.end [8/8] 0, 128
        %v1056 = vpop.trf.xlu0
        %v1057 = vpop.trf.xlu0
        %v1058 = vpop.trf.xlu0
        %v1059 = vpop.trf.xlu0
        %v1060 = vpop.trf.xlu0
        %v1061 = vpop.trf.xlu0
        %v1062 = vpop.trf.xlu0
        %v1063 = vpop.trf.xlu0
        %v1065 = vsel %vm895, %v1008, 0
        %v1068 = vsel %vm895, %v984, 0
        %1070 = vmatprep.subr.bf16.mxu0 0
        %1071 = vmatpush1.bf16.xpose.msra.mxu0 %v1068
        %1072 = vmatprep.subr.bf16.mxu0 0
        %1073 = vmatpush1.bf16.xpose.msra.mxu0 0
        %1074 = vmatprep.subr.bf16.mxu0 0
        %1075 = vmatpush1.bf16.xpose.msra.mxu0 0
        %1076 = vmatprep.subr.bf16.mxu0 0
        %1077 = vmatpush1.bf16.xpose.msra.mxu0 0
        %1078 = vmatprep.subr.bf16.mxu0 0
        %1079 = vmatpush1.bf16.xpose.msra.mxu0 0
        %1080 = vmatprep.subr.bf16.mxu0 0
        %1081 = vmatpush1.bf16.xpose.msra.mxu0 0
        %1082 = vmatprep.subr.bf16.mxu0 0
        %1083 = vmatpush1.bf16.xpose.msra.mxu0 0
        %1084 = vmatprep.subr.bf16.mxu0 0
        %1085 = vmatpush1.bf16.xpose.msra.mxu0 0
        %1086 = vmatprep.subr.bf16.mxu0 0
        %1087 = vmatpush1.bf16.xpose.msra.mxu0 0
        %1088 = vmatprep.subr.bf16.mxu0 0
        %1089 = vmatpush1.bf16.xpose.msra.mxu0 0
        %1090 = vmatprep.subr.bf16.mxu0 0
        %1091 = vmatpush1.bf16.xpose.msra.mxu0 0
        %1092 = vmatprep.subr.bf16.mxu0 0
        %1093 = vmatpush1.bf16.xpose.msra.mxu0 0
        %1094 = vmatprep.subr.bf16.mxu0 0
        %1095 = vmatpush1.bf16.xpose.msra.mxu0 0
        %1096 = vmatprep.subr.bf16.mxu0 0
        %1097 = vmatpush1.bf16.xpose.msra.mxu0 0
        %1098 = vmatprep.subr.bf16.mxu0 0
        %1099 = vmatpush1.bf16.xpose.msra.mxu0 0
        %1100 = vmatprep.subr.bf16.mxu0 0
        %1101 = vmatpush1.bf16.xpose.msra.mxu0 0
        %1102 = vmatprep.mubr.bf16.mxu0 0
        %1103 = vmatmul.mubr.bf16.gmra.mrb[0].mxu0 %v1065
        %v1104 = vpop.f32.mrb[0].mxu0
        %v1105 = vadd.f32 0.0, %v1104
        %v1106 = vpop.f32.mrb[0].mxu0
        %v1107 = vpop.f32.mrb[0].mxu0
        %v1108 = vpop.f32.mrb[0].mxu0
        %1109 = vdwg.mxu0
        %v1111 = vsel %vm895, %v1024, 0
        %v1114 = vsel %vm895, %v985, 0
        %1116 = vmatprep.subr.bf16.mxu0 0
        %1117 = vmatpush1.bf16.xpose.msra.mxu0 %v1114
        %1118 = vmatprep.subr.bf16.mxu0 0
        %1119 = vmatpush1.bf16.xpose.msra.mxu0 0
        %1120 = vmatprep.subr.bf16.mxu0 0
        %1121 = vmatpush1.bf16.xpose.msra.mxu0 0
        %1122 = vmatprep.subr.bf16.mxu0 0
        %1123 = vmatpush1.bf16.xpose.msra.mxu0 0
        %1124 = vmatprep.subr.bf16.mxu0 0
        %1125 = vmatpush1.bf16.xpose.msra.mxu0 0
        %1126 = vmatprep.subr.bf16.mxu0 0
        %1127 = vmatpush1.bf16.xpose.msra.mxu0 0
        %1128 = vmatprep.subr.bf16.mxu0 0
        %1129 = vmatpush1.bf16.xpose.msra.mxu0 0
        %1130 = vmatprep.subr.bf16.mxu0 0
        %1131 = vmatpush1.bf16.xpose.msra.mxu0 0
        %1132 = vmatprep.subr.bf16.mxu0 0
        %1133 = vmatpush1.bf16.xpose.msra.mxu0 0
        %1134 = vmatprep.subr.bf16.mxu0 0
        %1135 = vmatpush1.bf16.xpose.msra.mxu0 0
        %1136 = vmatprep.subr.bf16.mxu0 0
        %1137 = vmatpush1.bf16.xpose.msra.mxu0 0
        %1138 = vmatprep.subr.bf16.mxu0 0
        %1139 = vmatpush1.bf16.xpose.msra.mxu0 0
        %1140 = vmatprep.subr.bf16.mxu0 0
        %1141 = vmatpush1.bf16.xpose.msra.mxu0 0
        %1142 = vmatprep.subr.bf16.mxu0 0
        %1143 = vmatpush1.bf16.xpose.msra.mxu0 0
        %1144 = vmatprep.subr.bf16.mxu0 0
        %1145 = vmatpush1.bf16.xpose.msra.mxu0 0
        %1146 = vmatprep.subr.bf16.mxu0 0
        %1147 = vmatpush1.bf16.xpose.msra.mxu0 0
        %1148 = vmatprep.mubr.bf16.mxu0 0
        %1149 = vmatmul.mubr.bf16.gmra.mrb[0].mxu0 %v1111
        %v1150 = vpop.f32.mrb[0].mxu0
        %v1151 = vadd.f32 0.0, %v1150
        %v1152 = vpop.f32.mrb[0].mxu0
        %v1153 = vpop.f32.mrb[0].mxu0
        %v1154 = vpop.f32.mrb[0].mxu0
        %1155 = vdwg.mxu0
        %v1157 = vsel %vm895, %v1040, 0
        %v1160 = vsel %vm895, %v986, 0
        %1162 = vmatprep.subr.bf16.mxu0 0
        %1163 = vmatpush1.bf16.xpose.msra.mxu0 %v1160
        %1164 = vmatprep.subr.bf16.mxu0 0
        %1165 = vmatpush1.bf16.xpose.msra.mxu0 0
        %1166 = vmatprep.subr.bf16.mxu0 0
        %1167 = vmatpush1.bf16.xpose.msra.mxu0 0
        %1168 = vmatprep.subr.bf16.mxu0 0
        %1169 = vmatpush1.bf16.xpose.msra.mxu0 0
        %1170 = vmatprep.subr.bf16.mxu0 0
        %1171 = vmatpush1.bf16.xpose.msra.mxu0 0
        %1172 = vmatprep.subr.bf16.mxu0 0
        %1173 = vmatpush1.bf16.xpose.msra.mxu0 0
        %1174 = vmatprep.subr.bf16.mxu0 0
        %1175 = vmatpush1.bf16.xpose.msra.mxu0 0
        %1176 = vmatprep.subr.bf16.mxu0 0
        %1177 = vmatpush1.bf16.xpose.msra.mxu0 0
        %1178 = vmatprep.subr.bf16.mxu0 0
        %1179 = vmatpush1.bf16.xpose.msra.mxu0 0
        %1180 = vmatprep.subr.bf16.mxu0 0
        %1181 = vmatpush1.bf16.xpose.msra.mxu0 0
        %1182 = vmatprep.subr.bf16.mxu0 0
        %1183 = vmatpush1.bf16.xpose.msra.mxu0 0
        %1184 = vmatprep.subr.bf16.mxu0 0
        %1185 = vmatpush1.bf16.xpose.msra.mxu0 0
        %1186 = vmatprep.subr.bf16.mxu0 0
        %1187 = vmatpush1.bf16.xpose.msra.mxu0 0
        %1188 = vmatprep.subr.bf16.mxu0 0
        %1189 = vmatpush1.bf16.xpose.msra.mxu0 0
        %1190 = vmatprep.subr.bf16.mxu0 0
        %1191 = vmatpush1.bf16.xpose.msra.mxu0 0
        %1192 = vmatprep.subr.bf16.mxu0 0
        %1193 = vmatpush1.bf16.xpose.msra.mxu0 0
        %1194 = vmatprep.mubr.bf16.mxu0 0
        %1195 = vmatmul.mubr.bf16.gmra.mrb[0].mxu0 %v1157
        %v1196 = vpop.f32.mrb[0].mxu0
        %v1197 = vadd.f32 0.0, %v1196
        %v1198 = vpop.f32.mrb[0].mxu0
        %v1199 = vpop.f32.mrb[0].mxu0
        %v1200 = vpop.f32.mrb[0].mxu0
        %1201 = vdwg.mxu0
        %v1203 = vsel %vm895, %v1056, 0
        %v1206 = vsel %vm895, %v987, 0
        %1208 = vmatprep.subr.bf16.mxu0 0
        %1209 = vmatpush1.bf16.xpose.msra.mxu0 %v1206
        %1210 = vmatprep.subr.bf16.mxu0 0
        %1211 = vmatpush1.bf16.xpose.msra.mxu0 0
        %1212 = vmatprep.subr.bf16.mxu0 0
        %1213 = vmatpush1.bf16.xpose.msra.mxu0 0
        %1214 = vmatprep.subr.bf16.mxu0 0
        %1215 = vmatpush1.bf16.xpose.msra.mxu0 0
        %1216 = vmatprep.subr.bf16.mxu0 0
        %1217 = vmatpush1.bf16.xpose.msra.mxu0 0
        %1218 = vmatprep.subr.bf16.mxu0 0
        %1219 = vmatpush1.bf16.xpose.msra.mxu0 0
        %1220 = vmatprep.subr.bf16.mxu0 0
        %1221 = vmatpush1.bf16.xpose.msra.mxu0 0
        %1222 = vmatprep.subr.bf16.mxu0 0
        %1223 = vmatpush1.bf16.xpose.msra.mxu0 0
        %1224 = vmatprep.subr.bf16.mxu0 0
        %1225 = vmatpush1.bf16.xpose.msra.mxu0 0
        %1226 = vmatprep.subr.bf16.mxu0 0
        %1227 = vmatpush1.bf16.xpose.msra.mxu0 0
        %1228 = vmatprep.subr.bf16.mxu0 0
        %1229 = vmatpush1.bf16.xpose.msra.mxu0 0
        %1230 = vmatprep.subr.bf16.mxu0 0
        %1231 = vmatpush1.bf16.xpose.msra.mxu0 0
        %1232 = vmatprep.subr.bf16.mxu0 0
        %1233 = vmatpush1.bf16.xpose.msra.mxu0 0
        %1234 = vmatprep.subr.bf16.mxu0 0
        %1235 = vmatpush1.bf16.xpose.msra.mxu0 0
        %1236 = vmatprep.subr.bf16.mxu0 0
        %1237 = vmatpush1.bf16.xpose.msra.mxu0 0
        %1238 = vmatprep.subr.bf16.mxu0 0
        %1239 = vmatpush1.bf16.xpose.msra.mxu0 0
        %1240 = vmatprep.mubr.bf16.mxu0 0
        %1241 = vmatmul.mubr.bf16.gmra.mrb[0].mxu0 %v1203
        %v1242 = vpop.f32.mrb[0].mxu0
        %v1243 = vadd.f32 0.0, %v1242
        %v1244 = vpop.f32.mrb[0].mxu0
        %v1245 = vpop.f32.mrb[0].mxu0
        %v1246 = vpop.f32.mrb[0].mxu0
        %1247 = vdwg.mxu0
        %1248 = vxpose.xlu0.b32.start [1/16] %v1105, 128
        %1249 = vxpose.xlu0.b32.cont [2/16] 0.0, 128
        %1250 = vxpose.xlu0.b32.cont [3/16] 0.0, 128
        %1251 = vxpose.xlu0.b32.cont [4/16] 0.0, 128
        %1252 = vxpose.xlu0.b32.cont [5/16] 0.0, 128
        %1253 = vxpose.xlu0.b32.cont [6/16] 0.0, 128
        %1254 = vxpose.xlu0.b32.cont [7/16] 0.0, 128
        %1255 = vxpose.xlu0.b32.cont [8/16] 0.0, 128
        %1256 = vxpose.xlu0.b32.cont [9/16] 0.0, 128
        %1257 = vxpose.xlu0.b32.cont [10/16] 0.0, 128
        %1258 = vxpose.xlu0.b32.cont [11/16] 0.0, 128
        %1259 = vxpose.xlu0.b32.cont [12/16] 0.0, 128
        %1260 = vxpose.xlu0.b32.cont [13/16] 0.0, 128
        %1261 = vxpose.xlu0.b32.cont [14/16] 0.0, 128
        %1262 = vxpose.xlu0.b32.cont [15/16] 0.0, 128
        %1263 = vxpose.xlu0.b32.end [16/16] 0.0, 128
        %v1264 = vpop.trf.xlu0
        %v1265 = vpop.trf.xlu0
        %v1266 = vpop.trf.xlu0
        %v1267 = vpop.trf.xlu0
        %v1268 = vpop.trf.xlu0
        %v1269 = vpop.trf.xlu0
        %v1270 = vpop.trf.xlu0
        %v1271 = vpop.trf.xlu0
        %v1272 = vpop.trf.xlu0
        %v1273 = vpop.trf.xlu0
        %v1274 = vpop.trf.xlu0
        %v1275 = vpop.trf.xlu0
        %v1276 = vpop.trf.xlu0
        %v1277 = vpop.trf.xlu0
        %v1278 = vpop.trf.xlu0
        %v1279 = vpop.trf.xlu0
        %1280 = vxpose.xlu0.b32.start [1/16] %v1151, 128
        %1281 = vxpose.xlu0.b32.cont [2/16] 0.0, 128
        %1282 = vxpose.xlu0.b32.cont [3/16] 0.0, 128
        %1283 = vxpose.xlu0.b32.cont [4/16] 0.0, 128
        %1284 = vxpose.xlu0.b32.cont [5/16] 0.0, 128
        %1285 = vxpose.xlu0.b32.cont [6/16] 0.0, 128
        %1286 = vxpose.xlu0.b32.cont [7/16] 0.0, 128
        %1287 = vxpose.xlu0.b32.cont [8/16] 0.0, 128
        %1288 = vxpose.xlu0.b32.cont [9/16] 0.0, 128
        %1289 = vxpose.xlu0.b32.cont [10/16] 0.0, 128
        %1290 = vxpose.xlu0.b32.cont [11/16] 0.0, 128
        %1291 = vxpose.xlu0.b32.cont [12/16] 0.0, 128
        %1292 = vxpose.xlu0.b32.cont [13/16] 0.0, 128
        %1293 = vxpose.xlu0.b32.cont [14/16] 0.0, 128
        %1294 = vxpose.xlu0.b32.cont [15/16] 0.0, 128
        %1295 = vxpose.xlu0.b32.end [16/16] 0.0, 128
        %v1296 = vpop.trf.xlu0
        %v1297 = vpop.trf.xlu0
        %v1298 = vpop.trf.xlu0
        %v1299 = vpop.trf.xlu0
        %v1300 = vpop.trf.xlu0
        %v1301 = vpop.trf.xlu0
        %v1302 = vpop.trf.xlu0
        %v1303 = vpop.trf.xlu0
        %v1304 = vpop.trf.xlu0
        %v1305 = vpop.trf.xlu0
        %v1306 = vpop.trf.xlu0
        %v1307 = vpop.trf.xlu0
        %v1308 = vpop.trf.xlu0
        %v1309 = vpop.trf.xlu0
        %v1310 = vpop.trf.xlu0
        %v1311 = vpop.trf.xlu0
        %1312 = vxpose.xlu0.b32.start [1/16] %v1197, 128
        %1313 = vxpose.xlu0.b32.cont [2/16] 0.0, 128
        %1314 = vxpose.xlu0.b32.cont [3/16] 0.0, 128
        %1315 = vxpose.xlu0.b32.cont [4/16] 0.0, 128
        %1316 = vxpose.xlu0.b32.cont [5/16] 0.0, 128
        %1317 = vxpose.xlu0.b32.cont [6/16] 0.0, 128
        %1318 = vxpose.xlu0.b32.cont [7/16] 0.0, 128
        %1319 = vxpose.xlu0.b32.cont [8/16] 0.0, 128
        %1320 = vxpose.xlu0.b32.cont [9/16] 0.0, 128
        %1321 = vxpose.xlu0.b32.cont [10/16] 0.0, 128
        %1322 = vxpose.xlu0.b32.cont [11/16] 0.0, 128
        %1323 = vxpose.xlu0.b32.cont [12/16] 0.0, 128
        %1324 = vxpose.xlu0.b32.cont [13/16] 0.0, 128
        %1325 = vxpose.xlu0.b32.cont [14/16] 0.0, 128
        %1326 = vxpose.xlu0.b32.cont [15/16] 0.0, 128
        %1327 = vxpose.xlu0.b32.end [16/16] 0.0, 128
        %v1328 = vpop.trf.xlu0
        %v1329 = vpop.trf.xlu0
        %v1330 = vpop.trf.xlu0
        %v1331 = vpop.trf.xlu0
        %v1332 = vpop.trf.xlu0
        %v1333 = vpop.trf.xlu0
        %v1334 = vpop.trf.xlu0
        %v1335 = vpop.trf.xlu0
        %v1336 = vpop.trf.xlu0
        %v1337 = vpop.trf.xlu0
        %v1338 = vpop.trf.xlu0
        %v1339 = vpop.trf.xlu0
        %v1340 = vpop.trf.xlu0
        %v1341 = vpop.trf.xlu0
        %v1342 = vpop.trf.xlu0
        %v1343 = vpop.trf.xlu0
        %1344 = vxpose.xlu0.b32.start [1/16] %v1243, 128
        %1345 = vxpose.xlu0.b32.cont [2/16] 0.0, 128
        %1346 = vxpose.xlu0.b32.cont [3/16] 0.0, 128
        %1347 = vxpose.xlu0.b32.cont [4/16] 0.0, 128
        %1348 = vxpose.xlu0.b32.cont [5/16] 0.0, 128
        %1349 = vxpose.xlu0.b32.cont [6/16] 0.0, 128
        %1350 = vxpose.xlu0.b32.cont [7/16] 0.0, 128
        %1351 = vxpose.xlu0.b32.cont [8/16] 0.0, 128
        %1352 = vxpose.xlu0.b32.cont [9/16] 0.0, 128
        %1353 = vxpose.xlu0.b32.cont [10/16] 0.0, 128
        %1354 = vxpose.xlu0.b32.cont [11/16] 0.0, 128
        %1355 = vxpose.xlu0.b32.cont [12/16] 0.0, 128
        %1356 = vxpose.xlu0.b32.cont [13/16] 0.0, 128
        %1357 = vxpose.xlu0.b32.cont [14/16] 0.0, 128
        %1358 = vxpose.xlu0.b32.cont [15/16] 0.0, 128
        %1359 = vxpose.xlu0.b32.end [16/16] 0.0, 128
        %v1360 = vpop.trf.xlu0
        %v1361 = vpop.trf.xlu0
        %v1362 = vpop.trf.xlu0
        %v1363 = vpop.trf.xlu0
        %v1364 = vpop.trf.xlu0
        %v1365 = vpop.trf.xlu0
        %v1366 = vpop.trf.xlu0
        %v1367 = vpop.trf.xlu0
        %v1368 = vpop.trf.xlu0
        %v1369 = vpop.trf.xlu0
        %v1370 = vpop.trf.xlu0
        %v1371 = vpop.trf.xlu0
        %v1372 = vpop.trf.xlu0
        %v1373 = vpop.trf.xlu0
        %v1374 = vpop.trf.xlu0
        %v1375 = vpop.trf.xlu0
        %v1376 = vcombine.low %v1264, %v1328
        %v1377 = vcombine.high %v1264, %v1328
        %v1379 = vunpack.c.l.s4 1983009808
        %v1380 = vunpack.c.0.s8 %v1379
        %v1381 = vlaneseq
        %v1382 = vshrl.u32 %v1381, 7
        %v1383 = vsub.s32 %v1380, %v1382
        %v1384 = vrot.slane %v1376, %v1383
        %v1386 = vunpack.c.l.s4 1983009808
        %v1387 = vunpack.c.0.s8 %v1386
        %v1388 = vlaneseq
        %v1389 = vshrl.u32 %v1388, 7
        %v1390 = vsub.s32 %v1387, %v1389
        %v1391 = vrot.slane %v1377, %v1390
        %v1392 = vcombine.low %v1296, %v1360
        %v1393 = vcombine.high %v1296, %v1360
        %v1395 = vunpack.c.l.s4 1983009808
        %v1396 = vunpack.c.0.s8 %v1395
        %v1397 = vlaneseq
        %v1398 = vshrl.u32 %v1397, 7
        %v1399 = vsub.s32 %v1396, %v1398
        %v1400 = vrot.slane %v1392, %v1399
        %v1402 = vunpack.c.l.s4 1983009808
        %v1403 = vunpack.c.0.s8 %v1402
        %v1404 = vlaneseq
        %v1405 = vshrl.u32 %v1404, 7
        %v1406 = vsub.s32 %v1403, %v1405
        %v1407 = vrot.slane %v1393, %v1406
        %v1408 = vcombine.low %v1384, %v1400
        %v1409 = vcombine.high %v1384, %v1400
        %v1411 = vunpack.c.l.s4 1934713408
        %v1412 = vunpack.c.0.s8 %v1411
        %v1413 = vlaneseq
        %v1414 = vshrl.u32 %v1413, 7
        %v1415 = vsub.s32 %v1412, %v1414
        %v1416 = vrot.slane %v1408, %v1415
        %v1418 = vunpack.c.l.s4 1934713408
        %v1419 = vunpack.c.0.s8 %v1418
        %v1420 = vlaneseq
        %v1421 = vshrl.u32 %v1420, 7
        %v1422 = vsub.s32 %v1419, %v1421
        %v1423 = vrot.slane %v1409, %v1422
        %v1424 = vcombine.low %v1391, %v1407
        %v1425 = vcombine.high %v1391, %v1407
        %v1427 = vunpack.c.l.s4 1934713408
        %v1428 = vunpack.c.0.s8 %v1427
        %v1429 = vlaneseq
        %v1430 = vshrl.u32 %v1429, 7
        %v1431 = vsub.s32 %v1428, %v1430
        %v1432 = vrot.slane %v1424, %v1431
        %v1434 = vunpack.c.l.s4 1934713408
        %v1435 = vunpack.c.0.s8 %v1434
        %v1436 = vlaneseq
        %v1437 = vshrl.u32 %v1436, 7
        %v1438 = vsub.s32 %v1435, %v1437
        %v1439 = vrot.slane %v1425, %v1438
        %v1440 = vcombine.high %v1416, 0.0
        %v1441 = vcombine.high %v1423, 0.0
        %v1442 = vcombine.high %v1432, 0.0
        %v1443 = vcombine.high %v1439, 0.0
        %v1444 = vcombine.low %v1265, %v1329
        %v1445 = vcombine.high %v1265, %v1329
        %v1447 = vunpack.c.l.s4 1983009808
        %v1448 = vunpack.c.0.s8 %v1447
        %v1449 = vlaneseq
        %v1450 = vshrl.u32 %v1449, 7
        %v1451 = vsub.s32 %v1448, %v1450
        %v1452 = vrot.slane %v1444, %v1451
        %v1454 = vunpack.c.l.s4 1983009808
        %v1455 = vunpack.c.0.s8 %v1454
        %v1456 = vlaneseq
        %v1457 = vshrl.u32 %v1456, 7
        %v1458 = vsub.s32 %v1455, %v1457
        %v1459 = vrot.slane %v1445, %v1458
        %v1460 = vcombine.low %v1297, %v1361
        %v1461 = vcombine.high %v1297, %v1361
        %v1463 = vunpack.c.l.s4 1983009808
        %v1464 = vunpack.c.0.s8 %v1463
        %v1465 = vlaneseq
        %v1466 = vshrl.u32 %v1465, 7
        %v1467 = vsub.s32 %v1464, %v1466
        %v1468 = vrot.slane %v1460, %v1467
        %v1470 = vunpack.c.l.s4 1983009808
        %v1471 = vunpack.c.0.s8 %v1470
        %v1472 = vlaneseq
        %v1473 = vshrl.u32 %v1472, 7
        %v1474 = vsub.s32 %v1471, %v1473
        %v1475 = vrot.slane %v1461, %v1474
        %v1476 = vcombine.low %v1452, %v1468
        %v1477 = vcombine.high %v1452, %v1468
        %v1479 = vunpack.c.l.s4 1934713408
        %v1480 = vunpack.c.0.s8 %v1479
        %v1481 = vlaneseq
        %v1482 = vshrl.u32 %v1481, 7
        %v1483 = vsub.s32 %v1480, %v1482
        %v1484 = vrot.slane %v1476, %v1483
        %v1486 = vunpack.c.l.s4 1934713408
        %v1487 = vunpack.c.0.s8 %v1486
        %v1488 = vlaneseq
        %v1489 = vshrl.u32 %v1488, 7
        %v1490 = vsub.s32 %v1487, %v1489
        %v1491 = vrot.slane %v1477, %v1490
        %v1492 = vcombine.low %v1459, %v1475
        %v1493 = vcombine.high %v1459, %v1475
        %v1495 = vunpack.c.l.s4 1934713408
        %v1496 = vunpack.c.0.s8 %v1495
        %v1497 = vlaneseq
        %v1498 = vshrl.u32 %v1497, 7
        %v1499 = vsub.s32 %v1496, %v1498
        %v1500 = vrot.slane %v1492, %v1499
        %v1502 = vunpack.c.l.s4 1934713408
        %v1503 = vunpack.c.0.s8 %v1502
        %v1504 = vlaneseq
        %v1505 = vshrl.u32 %v1504, 7
        %v1506 = vsub.s32 %v1503, %v1505
        %v1507 = vrot.slane %v1493, %v1506
        %v1508 = vcombine.high %v1484, 0.0
        %v1509 = vcombine.high %v1491, 0.0
        %v1510 = vcombine.high %v1500, 0.0
        %v1511 = vcombine.high %v1507, 0.0
        %v1512 = vcombine.low %v1416, %v1423
        %v1514 = vunpack.c.l.s4 1983009808
        %v1515 = vunpack.c.0.s8 %v1514
        %v1516 = vlaneseq
        %v1517 = vshrl.u32 %v1516, 7
        %v1518 = vsub.s32 %v1515, %v1517
        %v1519 = vrot.slane %v1512, %v1518
        %v1520 = vcombine.low %v1440, %v1441
        %v1522 = vunpack.c.l.s4 1983009808
        %v1523 = vunpack.c.0.s8 %v1522
        %v1524 = vlaneseq
        %v1525 = vshrl.u32 %v1524, 7
        %v1526 = vsub.s32 %v1523, %v1525
        %v1527 = vrot.slane %v1520, %v1526
        %v1528 = vcombine.low %v1432, %v1439
        %v1530 = vunpack.c.l.s4 1983009808
        %v1531 = vunpack.c.0.s8 %v1530
        %v1532 = vlaneseq
        %v1533 = vshrl.u32 %v1532, 7
        %v1534 = vsub.s32 %v1531, %v1533
        %v1535 = vrot.slane %v1528, %v1534
        %v1536 = vcombine.low %v1442, %v1443
        %v1538 = vunpack.c.l.s4 1983009808
        %v1539 = vunpack.c.0.s8 %v1538
        %v1540 = vlaneseq
        %v1541 = vshrl.u32 %v1540, 7
        %v1542 = vsub.s32 %v1539, %v1541
        %v1543 = vrot.slane %v1536, %v1542
        %v1544 = vcombine.low %v1519, %v1527
        %v1545 = vcombine.high %v1519, %v1527
        %v1547 = vunpack.c.l.s4 1934713408
        %v1548 = vunpack.c.0.s8 %v1547
        %v1549 = vlaneseq
        %v1550 = vshrl.u32 %v1549, 7
        %v1551 = vsub.s32 %v1548, %v1550
        %v1552 = vrot.slane %v1544, %v1551
        %v1554 = vunpack.c.l.s4 1934713408
        %v1555 = vunpack.c.0.s8 %v1554
        %v1556 = vlaneseq
        %v1557 = vshrl.u32 %v1556, 7
        %v1558 = vsub.s32 %v1555, %v1557
        %v1559 = vrot.slane %v1545, %v1558
        %v1560 = vcombine.low %v1535, %v1543
        %v1561 = vcombine.high %v1535, %v1543
        %v1563 = vunpack.c.l.s4 1934713408
        %v1564 = vunpack.c.0.s8 %v1563
        %v1565 = vlaneseq
        %v1566 = vshrl.u32 %v1565, 7
        %v1567 = vsub.s32 %v1564, %v1566
        %v1568 = vrot.slane %v1560, %v1567
        %v1570 = vunpack.c.l.s4 1934713408
        %v1571 = vunpack.c.0.s8 %v1570
        %v1572 = vlaneseq
        %v1573 = vshrl.u32 %v1572, 7
        %v1574 = vsub.s32 %v1571, %v1573
        %v1575 = vrot.slane %v1561, %v1574
        %v1576 = vcombine.low %v1552, %v1568
        %v1577 = vcombine.high %v1552, %v1568
        %v1578 = vcombine.low %v1559, %v1575
        %v1579 = vcombine.high %v1559, %v1575
        %v1580 = vcombine.low %v1484, %v1491
        %v1582 = vunpack.c.l.s4 1983009808
        %v1583 = vunpack.c.0.s8 %v1582
        %v1584 = vlaneseq
        %v1585 = vshrl.u32 %v1584, 7
        %v1586 = vsub.s32 %v1583, %v1585
        %v1587 = vrot.slane %v1580, %v1586
        %v1588 = vcombine.low %v1508, %v1509
        %v1590 = vunpack.c.l.s4 1983009808
        %v1591 = vunpack.c.0.s8 %v1590
        %v1592 = vlaneseq
        %v1593 = vshrl.u32 %v1592, 7
        %v1594 = vsub.s32 %v1591, %v1593
        %v1595 = vrot.slane %v1588, %v1594
        %v1596 = vcombine.low %v1500, %v1507
        %v1598 = vunpack.c.l.s4 1983009808
        %v1599 = vunpack.c.0.s8 %v1598
        %v1600 = vlaneseq
        %v1601 = vshrl.u32 %v1600, 7
        %v1602 = vsub.s32 %v1599, %v1601
        %v1603 = vrot.slane %v1596, %v1602
        %v1604 = vcombine.low %v1510, %v1511
        %v1606 = vunpack.c.l.s4 1983009808
        %v1607 = vunpack.c.0.s8 %v1606
        %v1608 = vlaneseq
        %v1609 = vshrl.u32 %v1608, 7
        %v1610 = vsub.s32 %v1607, %v1609
        %v1611 = vrot.slane %v1604, %v1610
        %v1612 = vcombine.low %v1587, %v1595
        %v1613 = vcombine.high %v1587, %v1595
        %v1615 = vunpack.c.l.s4 1934713408
        %v1616 = vunpack.c.0.s8 %v1615
        %v1617 = vlaneseq
        %v1618 = vshrl.u32 %v1617, 7
        %v1619 = vsub.s32 %v1616, %v1618
        %v1620 = vrot.slane %v1612, %v1619
        %v1622 = vunpack.c.l.s4 1934713408
        %v1623 = vunpack.c.0.s8 %v1622
        %v1624 = vlaneseq
        %v1625 = vshrl.u32 %v1624, 7
        %v1626 = vsub.s32 %v1623, %v1625
        %v1627 = vrot.slane %v1613, %v1626
        %v1628 = vcombine.low %v1603, %v1611
        %v1629 = vcombine.high %v1603, %v1611
        %v1631 = vunpack.c.l.s4 1934713408
        %v1632 = vunpack.c.0.s8 %v1631
        %v1633 = vlaneseq
        %v1634 = vshrl.u32 %v1633, 7
        %v1635 = vsub.s32 %v1632, %v1634
        %v1636 = vrot.slane %v1628, %v1635
        %v1638 = vunpack.c.l.s4 1934713408
        %v1639 = vunpack.c.0.s8 %v1638
        %v1640 = vlaneseq
        %v1641 = vshrl.u32 %v1640, 7
        %v1642 = vsub.s32 %v1639, %v1641
        %v1643 = vrot.slane %v1629, %v1642
        %v1644 = vcombine.low %v1620, %v1636
        %v1645 = vcombine.high %v1620, %v1636
        %v1646 = vcombine.low %v1627, %v1643
        %v1647 = vcombine.high %v1627, %v1643
        %1650 = vrot.lane.b32.xlu0 %v1577, 8
        %v1651 = vpop.permute.xlu0 %1650
        %1652 = vrot.lane.b32.xlu0 %v1645, 8
        %v1653 = vpop.permute.xlu0 %1652
        %1658 = vrot.lane.b32.xlu0 %v1578, 16
        %v1659 = vpop.permute.xlu0 %1658
        %1660 = vrot.lane.b32.xlu0 %v1646, 16
        %v1661 = vpop.permute.xlu0 %1660
        %1666 = vrot.lane.b32.xlu0 %v1579, 24
        %v1667 = vpop.permute.xlu0 %1666
        %1668 = vrot.lane.b32.xlu0 %v1647, 24
        %v1669 = vpop.permute.xlu0 %1668
        %v1672 = vsel %vm705, %v1576, %v1651
        %v1673 = vsel %vm705, %v1644, %v1653
        %v1674 = vsel %vm895, %v1672, %v1659
        %v1675 = vsel %vm895, %v1673, %v1661
        %vm1676 = vcmask 195584
        %v1677 = vsel %vm1676, %v1674, %v1667
        %v1678 = vsel %vm1676, %v1675, %v1669
        %v1679 = vpack.c.bf16 %v1678, %v1677
        %v1680 = vld [vmem:[#allocation5] sm:$0xf]
        %v1681 = vld [vmem:[#allocation5 + $0x4] sm:$0xf]
        %v1682 = vld [vmem:[#allocation5 + $0x8] sm:$0xf]
        %v1683 = vld [vmem:[#allocation5 + $0xc] sm:$0xf]
        %v1684 = vld [vmem:[#allocation7] sm:$0x1]
        %v1686 = vlaneseq
        %v1687 = vshrl.u32 %v1686, 7
        %v1688 = vsub.s32 0, %v1687
        %v1689 = vrot.slane %v1684, %v1688
        %v1695 = vunpack.c.l.b16 %v1680
        %v1696 = vunpack.c.l.b16 %v1681
        %v1697 = vunpack.c.l.b16 %v1682
        %v1698 = vunpack.c.l.b16 %v1683
        %v1699 = vpack.c.b16 %v1696, %v1695
        %v1700 = vpack.c.b16 %v1698, %v1697
        %v1704 = vsel %vm509, %v1679, 0
        %1706 = vmatprep.subr.bf16.mxu0 0
        %1707 = vmatpush1.bf16.msra.mxu0 %v1699
        %1708 = vmatprep.subr.bf16.mxu0 0
        %1709 = vmatpush1.bf16.msra.mxu0 %v1700
        %1710 = vmatprep.subr.bf16.mxu0 0
        %1711 = vmatpush1.bf16.msra.mxu0 0
        %1712 = vmatprep.subr.bf16.mxu0 0
        %1713 = vmatpush1.bf16.msra.mxu0 0
        %1714 = vmatprep.subr.bf16.mxu0 0
        %1715 = vmatpush1.bf16.msra.mxu0 0
        %1716 = vmatprep.subr.bf16.mxu0 0
        %1717 = vmatpush1.bf16.msra.mxu0 0
        %1718 = vmatprep.subr.bf16.mxu0 0
        %1719 = vmatpush1.bf16.msra.mxu0 0
        %1720 = vmatprep.subr.bf16.mxu0 0
        %1721 = vmatpush1.bf16.msra.mxu0 0
        %1722 = vmatprep.subr.bf16.mxu0 0
        %1723 = vmatpush1.bf16.msra.mxu0 0
        %1724 = vmatprep.subr.bf16.mxu0 0
        %1725 = vmatpush1.bf16.msra.mxu0 0
        %1726 = vmatprep.subr.bf16.mxu0 0
        %1727 = vmatpush1.bf16.msra.mxu0 0
        %1728 = vmatprep.subr.bf16.mxu0 0
        %1729 = vmatpush1.bf16.msra.mxu0 0
        %1730 = vmatprep.subr.bf16.mxu0 0
        %1731 = vmatpush1.bf16.msra.mxu0 0
        %1732 = vmatprep.subr.bf16.mxu0 0
        %1733 = vmatpush1.bf16.msra.mxu0 0
        %1734 = vmatprep.subr.bf16.mxu0 0
        %1735 = vmatpush1.bf16.msra.mxu0 0
        %1736 = vmatprep.subr.bf16.mxu0 0
        %1737 = vmatpush1.bf16.msra.mxu0 0
        %1738 = vmatprep.mubr.bf16.mxu0 0
        %1739 = vmatmul.mubr.bf16.gmra.mrb[0].mxu0 %v1704
        %v1740 = vpop.f32.mrb[0].mxu0
        %v1741 = vadd.f32 %v1689, %v1740
        %v1742 = vpop.f32.mrb[0].mxu0
        %v1743 = vpop.f32.mrb[0].mxu0
        %v1744 = vadd.f32 %v1689, %v1743
        %v1745 = vpop.f32.mrb[0].mxu0
        %1746 = vdwg.mxu0
        %v1747 = vadd.f32 %v505, %v1741
        %v1748 = vadd.f32 %v506, %v1744
        %v1749 = vld [vmem:[#allocation8] sm:$0x1]
        %v1750 = vld [vmem:[#allocation10] sm:$0x1]
        %v1751 = vsel %vm509, %v1747, 0.0
        %1752 = vadd.xlane.f32.xlu0 %v1751
        %v1753 = vpop.xlane.xlu0 %1752
        %v1754 = vsel %vm509, %v1748, 0.0
        %1755 = vadd.xlane.f32.xlu0 %v1754
        %v1756 = vpop.xlane.xlu0 %1755
        %v1757 = vmul.f32 %v1753, %v516
        %v1758 = vmul.f32 %v1756, %v516
        %v1759 = vsub.f32 %v1747, %v1757
        %v1760 = vsub.f32 %v1748, %v1758
        %v1761 = vmul.f32 %v1759, %v1759
        %v1762 = vmul.f32 %v1760, %v1760
        %v1763 = vsel %vm509, %v1761, 0.0
        %1764 = vadd.xlane.f32.xlu0 %v1763
        %v1765 = vpop.xlane.xlu0 %1764
        %v1766 = vsel %vm509, %v1762, 0.0
        %1767 = vadd.xlane.f32.xlu0 %v1766
        %v1768 = vpop.xlane.xlu0 %1767
        %v1769 = vmul.f32 %v1765, %v516
        %v1770 = vmul.f32 %v1768, %v516
        %v1771 = vadd.f32 %v1769, 1e-06
        %v1772 = vadd.f32 %v1770, 1e-06
        %v1773 = vrsqrt.pop %v1771
        %v1774 = vrsqrt.pop %v1772
        %v1775 = vmul.f32 %v1759, %v1773
        %v1776 = vmul.f32 %v1760, %v1774
        %v1778 = vlaneseq
        %v1779 = vshrl.u32 %v1778, 7
        %v1780 = vsub.s32 0, %v1779
        %v1781 = vrot.slane %v1749, %v1780
        %v1783 = vmul.f32 %v1775, %v1781
        %v1784 = vmul.f32 %v1776, %v1781
        %v1786 = vlaneseq
        %v1787 = vshrl.u32 %v1786, 7
        %v1788 = vsub.s32 0, %v1787
        %v1789 = vrot.slane %v1750, %v1788
        %v1791 = vadd.f32 %v1783, %v1789
        %v1792 = vadd.f32 %v1784, %v1789
        %v1793 = vpack.c.bf16 %v1792, %v1791
        %v1794 = vld [vmem:[%s9] sm:$0xf]
        %v1795 = vld [vmem:[%s9 + $0x4] sm:$0xf]
        %v1796 = vld [vmem:[%s9 + $0x8] sm:$0xf]
        %v1797 = vld [vmem:[%s9 + $0xc] sm:$0xf]
        %v1798 = vld [vmem:[%s10] sm:$0x1]
        %v1800 = vlaneseq
        %v1801 = vshrl.u32 %v1800, 7
        %v1802 = vsub.s32 0, %v1801
        %v1803 = vrot.slane %v1798, %v1802
        %v1809 = vunpack.c.l.b16 %v1794
        %v1810 = vunpack.c.l.b16 %v1795
        %v1811 = vunpack.c.l.b16 %v1796
        %v1812 = vunpack.c.l.b16 %v1797
        %v1813 = vpack.c.b16 %v1810, %v1809
        %v1814 = vpack.c.b16 %v1812, %v1811
        %v1818 = vsel %vm509, %v1793, 0
        %1820 = vmatprep.subr.bf16.mxu0 0
        %1821 = vmatpush1.bf16.msra.mxu0 %v1813
        %1822 = vmatprep.subr.bf16.mxu0 0
        %1823 = vmatpush1.bf16.msra.mxu0 %v1814
        %1824 = vmatprep.subr.bf16.mxu0 0
        %1825 = vmatpush1.bf16.msra.mxu0 0
        %1826 = vmatprep.subr.bf16.mxu0 0
        %1827 = vmatpush1.bf16.msra.mxu0 0
        %1828 = vmatprep.subr.bf16.mxu0 0
        %1829 = vmatpush1.bf16.msra.mxu0 0
        %1830 = vmatprep.subr.bf16.mxu0 0
        %1831 = vmatpush1.bf16.msra.mxu0 0
        %1832 = vmatprep.subr.bf16.mxu0 0
        %1833 = vmatpush1.bf16.msra.mxu0 0
        %1834 = vmatprep.subr.bf16.mxu0 0
        %1835 = vmatpush1.bf16.msra.mxu0 0
        %1836 = vmatprep.subr.bf16.mxu0 0
        %1837 = vmatpush1.bf16.msra.mxu0 0
        %1838 = vmatprep.subr.bf16.mxu0 0
        %1839 = vmatpush1.bf16.msra.mxu0 0
        %1840 = vmatprep.subr.bf16.mxu0 0
        %1841 = vmatpush1.bf16.msra.mxu0 0
        %1842 = vmatprep.subr.bf16.mxu0 0
        %1843 = vmatpush1.bf16.msra.mxu0 0
        %1844 = vmatprep.subr.bf16.mxu0 0
        %1845 = vmatpush1.bf16.msra.mxu0 0
        %1846 = vmatprep.subr.bf16.mxu0 0
        %1847 = vmatpush1.bf16.msra.mxu0 0
        %1848 = vmatprep.subr.bf16.mxu0 0
        %1849 = vmatpush1.bf16.msra.mxu0 0
        %1850 = vmatprep.subr.bf16.mxu0 0
        %1851 = vmatpush1.bf16.msra.mxu0 0
        %1852 = vmatprep.mubr.bf16.mxu0 0
        %1853 = vmatmul.mubr.bf16.gmra.mrb[0].mxu0 %v1818
        %v1854 = vpop.f32.mrb[0].mxu0
        %v1855 = vadd.f32 %v1803, %v1854
        %v1856 = vpop.f32.mrb[0].mxu0
        %v1857 = vpop.f32.mrb[0].mxu0
        %v1858 = vadd.f32 %v1803, %v1857
        %v1859 = vpop.f32.mrb[0].mxu0
        %1860 = vdwg.mxu0
        %v1861 = vmul.f32 %v1855, 0.5
        %v1862 = vmul.f32 %v1858, 0.5
        %v1863 = vmul.f32 %v1855, 0.044715
        %v1864 = vmul.f32 %v1858, 0.044715
        %v1865 = vmul.f32 %v1863, %v1855
        %v1866 = vmul.f32 %v1864, %v1858
        %v1867 = vmul.f32 %v1865, %v1855
        %v1868 = vmul.f32 %v1866, %v1858
        %v1869 = vadd.f32 %v1855, %v1867
        %v1870 = vadd.f32 %v1858, %v1868
        %v1871 = vmul.f32 %v1869, 0.7978846
        %v1872 = vmul.f32 %v1870, 0.7978846
        %v1873 = vtanh.pop %v1871
        %v1874 = vtanh.pop %v1872
        %v1875 = vadd.f32 %v1873, 1.0
        %v1876 = vadd.f32 %v1874, 1.0
        %v1877 = vmul.f32 %v1861, %v1875
        %v1878 = vmul.f32 %v1862, %v1876
        %v1879 = vpack.c.bf16 %v1878, %v1877
        %v1880 = vld [vmem:[%s11] sm:$0xf]
        %v1881 = vld [vmem:[%s11 + $0x4] sm:$0xf]
        %v1882 = vld [vmem:[%s11 + $0x8] sm:$0xf]
        %v1883 = vld [vmem:[%s11 + $0xc] sm:$0xf]
        %v1884 = vld [vmem:[%s11 + $0x10] sm:$0xf]
        %v1885 = vld [vmem:[%s11 + $0x14] sm:$0xf]
        %v1886 = vld [vmem:[%s11 + $0x18] sm:$0xf]
        %v1887 = vld [vmem:[%s11 + $0x1c] sm:$0xf]
        %v1888 = vld [vmem:[%s12] sm:$0x1]
        %v1890 = vlaneseq
        %v1891 = vshrl.u32 %v1890, 7
        %v1892 = vsub.s32 0, %v1891
        %v1893 = vrot.slane %v1888, %v1892
        %v1903 = vunpack.c.l.b16 %v1880
        %v1904 = vunpack.c.l.b16 %v1881
        %v1905 = vunpack.c.l.b16 %v1882
        %v1906 = vunpack.c.l.b16 %v1883
        %v1907 = vunpack.c.l.b16 %v1884
        %v1908 = vunpack.c.l.b16 %v1885
        %v1909 = vunpack.c.l.b16 %v1886
        %v1910 = vunpack.c.l.b16 %v1887
        %v1911 = vpack.c.b16 %v1904, %v1903
        %v1912 = vpack.c.b16 %v1906, %v1905
        %v1913 = vpack.c.b16 %v1908, %v1907
        %v1914 = vpack.c.b16 %v1910, %v1909
        %vm1919 = vcmask 523264
        %v1921 = vsel %vm1919, %v1879, 0
        %1923 = vmatprep.subr.bf16.mxu0 0
        %1924 = vmatpush1.bf16.msra.mxu0 %v1911
        %1925 = vmatprep.subr.bf16.mxu0 0
        %1926 = vmatpush1.bf16.msra.mxu0 %v1912
        %1927 = vmatprep.subr.bf16.mxu0 0
        %1928 = vmatpush1.bf16.msra.mxu0 %v1913
        %1929 = vmatprep.subr.bf16.mxu0 0
        %1930 = vmatpush1.bf16.msra.mxu0 %v1914
        %1931 = vmatprep.subr.bf16.mxu0 0
        %1932 = vmatpush1.bf16.msra.mxu0 0
        %1933 = vmatprep.subr.bf16.mxu0 0
        %1934 = vmatpush1.bf16.msra.mxu0 0
        %1935 = vmatprep.subr.bf16.mxu0 0
        %1936 = vmatpush1.bf16.msra.mxu0 0
        %1937 = vmatprep.subr.bf16.mxu0 0
        %1938 = vmatpush1.bf16.msra.mxu0 0
        %1939 = vmatprep.subr.bf16.mxu0 0
        %1940 = vmatpush1.bf16.msra.mxu0 0
        %1941 = vmatprep.subr.bf16.mxu0 0
        %1942 = vmatpush1.bf16.msra.mxu0 0
        %1943 = vmatprep.subr.bf16.mxu0 0
        %1944 = vmatpush1.bf16.msra.mxu0 0
        %1945 = vmatprep.subr.bf16.mxu0 0
        %1946 = vmatpush1.bf16.msra.mxu0 0
        %1947 = vmatprep.subr.bf16.mxu0 0
        %1948 = vmatpush1.bf16.msra.mxu0 0
        %1949 = vmatprep.subr.bf16.mxu0 0
        %1950 = vmatpush1.bf16.msra.mxu0 0
        %1951 = vmatprep.subr.bf16.mxu0 0
        %1952 = vmatpush1.bf16.msra.mxu0 0
        %1953 = vmatprep.subr.bf16.mxu0 0
        %1954 = vmatpush1.bf16.msra.mxu0 0
        %1955 = vmatprep.mubr.bf16.mxu0 0
        %1956 = vmatmul.mubr.bf16.gmra.mrb[0].mxu0 %v1921
        %v1957 = vpop.f32.mrb[0].mxu0
        %v1958 = vadd.f32 %v1893, %v1957
        %v1959 = vpop.f32.mrb[0].mxu0
        %v1960 = vpop.f32.mrb[0].mxu0
        %v1961 = vadd.f32 %v1893, %v1960
        %v1962 = vpop.f32.mrb[0].mxu0
        %1963 = vdwg.mxu0
        %v1964 = vadd.f32 %v1747, %v1958
        %v1965 = vadd.f32 %v1748, %v1961
        %1966 = vst.msk [vmem:[%s498] sm:$0xff] %vm509, %v1964
        %1967 = vst.msk [vmem:[%s498 + $0x8] sm:$0xff] %vm509, %v1965
        %s1968 = sand.u32 %s316, 1
        %s1969 = scalar_lea.sflag [#allocation4], %s1968
        %s1970 = sand.u32 %s316, 1
        %s1971 = smul.addr %s1970, 16
        %s1972 = scalar_lea.vmem [#allocation11], %s1971
        // Predicated region
        $region93: #{tpu_custom_call.1} parent=71 // pred_check
          %p1973 = pneg %p326
        $region94: #{tpu_custom_call.1} parent=71 // pred_check_branch
          %1975 = sbr.rel (%p1973) target = $region96
        $region95: #{tpu_custom_call.1} parent=71 // pred_region
          %s1977 = ssub.s32 256, 256
          %1978 = vsyncadd %s1969, %s1977
          %s1979 = smul.addr %s30, 2
          %s1980 = smul.addr %s1979, 128
          %s1981 = scalar_lea.hbm %s13, %s1980
          %s1982 = sshll.u32 %s1972, 4
          %s1983 = int_to_ptr.vmem [resolvable:$true] %s1982
          %1988 = dma.vmem_to_hbm [thread:$0]  %s1983, 256, %s1981, %s1969, 128, 128, 8
        $region96: #{tpu_custom_call.1} parent=71 // pred_fallthru
          _
      $region72: #{tpu_custom_call.1} parent=5 // pred_fallthru
        _
      %p1989 = scmp.le.s32.totalorder 2, %s25
      // Predicated region
      $region97: #{tpu_custom_call.1} parent=5 // pred_check
        %p1990 = pneg %p1989
      $region98: #{tpu_custom_call.1} parent=5 // pred_check_branch
        %1992 = sbr.rel (%p1990) target = $region100
      $region99: #{tpu_custom_call.1} parent=5 // pred_region
        %s1993 = ssub.s32 %s25, 2
        // Predicated region
        $region101: #{tpu_custom_call.1} parent=99 // pred_check
          %p1994 = pneg %p332
        $region102: #{tpu_custom_call.1} parent=99 // pred_check_branch
          %1996 = sbr.rel (%p1994) target = $region104
        $region103: #{tpu_custom_call.1} parent=99 // pred_region
          %s1997 = sand.u32 %s317, 1
          %s1998 = scalar_lea.sflag [#allocation4], %s1997
          %s1999 = sand.u32 %s317, 1
          %s2000 = smul.addr %s1999, 16
          %s2001 = scalar_lea.vmem [#allocation11], %s2000
          %2002 = dma.done %s1998, 256
        $region104: #{tpu_custom_call.1} parent=99 // pred_fallthru
          _
      $region100: #{tpu_custom_call.1} parent=5 // pred_fallthru
        _
    $region6: #{tpu_custom_call.1} parent=1 // loop_footer
      %s29 = sadd.s32 1, %s25
    $region7: #{tpu_custom_call.1} parent=1 // loop_footer_branch
      %24 = sbr.rel target = $region3
    $region8: #{tpu_custom_call.1} parent=1 // loop_exit
      _
    %2003 = vsyncpa [#allocation3], 1
    %s2004 = scalar_lea.sflag [#allocation3], 1
    %2005 = vsyncpa %s2004, 1
    %2006 = vsyncpa [#allocation6], 1
    %2007 = vsyncpa [#allocation9], 1
    %2008 = vsyncpa [#allocation4], 1
    %s2009 = scalar_lea.sflag [#allocation4], 1
    %2010 = vsyncpa %s2009, 1

</llo_original>
